<compile_context>
chip_gen: v5e
topology: v5e:2x2
jax: 0.10.0
libtpu: 0.0.40
codegen_flags: <defaults>
</compile_context>

<pallas_src>
import functools

import jax
import jax.numpy as jnp
from jax.experimental import pallas as pl
from jax.experimental.pallas import tpu as pltpu

# ---- model dimensions (fixed by the PyTorch module) -------------------------
C_OUT, K, H_IN, W_IN = 3, 5, 50, 50
H_OUT, W_OUT = H_IN - K + 1, W_IN - K + 1        # 46, 46
FLAT = C_OUT * H_OUT * W_OUT                     # 6348
HID, OUT = 120, 3

# ---- kernel-side (padded / re-laid-out) dimensions --------------------------
HID_PAD = 128                                    # fc1 width padded to a lane tile
Q_RAW = H_OUT * W_IN                             # 2300: conv rows on the 50-wide grid
QPAD = 2304                                      # fc1 contraction dim (36 * 64)
Q_CHUNK = 64                                     # conv rows per inner step (vreg-safe)
N_CHUNKS = QPAD // Q_CHUNK                       # 36
MAX_SHIFT = (K - 1) * W_IN + (K - 1)             # 204: largest conv tap offset
Q_IN = H_IN * W_IN                               # 2500
Q_IN_PAD = ((QPAD + MAX_SHIFT + 7) // 8) * 8     # 2512: padded input rows (>= 2508)


# -----------------------------------------------------------------------------
# Fused kernel: conv(5x5, 1->3) + ReLU + fc1(->128) + ReLU + fc2(->3)
# for one batch tile of TB images (batch on the lane dimension).
# -----------------------------------------------------------------------------
def calvis_fused_kernel(wc_ref, bc_ref, x_ref, w1_ref, b1_ref, w2_ref, b2_ref,
                        o_ref, z1_ref):
    # wc_ref : SMEM (C_OUT*K*K,) f32      conv weights, (c, ki, kj) row-major
    # bc_ref : SMEM (C_OUT,)     f32      conv bias
    # x_ref  : VMEM (Q_IN_PAD, TB) f32    TB flattened images as columns
    # w1_ref : VMEM (C_OUT*N_CHUNKS, HID_PAD, Q_CHUNK) bf16  fc1 weight chunks
    # b1_ref : VMEM (HID_PAD, 1) f32
    # w2_ref : VMEM (OUT, HID_PAD) f32
    # b2_ref : VMEM (OUT, 1) f32
    # o_ref  : VMEM (OUT, TB) f32
    # z1_ref : VMEM scratch (HID_PAD, TB) f32   fused fc1 accumulator
    tb = x_ref.shape[1]

    # Hoist the scalar weight/bias reads out of the chunk loop (they are not
    # CSE'd and would otherwise re-issue 78 SMEM loads every iteration).
    wcs = [[wc_ref[c * K * K + t] for t in range(K * K)] for c in range(C_OUT)]
    bcs = [bc_ref[c] for c in range(C_OUT)]

    # fc1 accumulator starts at the fc1 bias (broadcast across the batch lanes).
    z1_ref[...] = jnp.broadcast_to(b1_ref[...], (HID_PAD, tb))

    # ---- conv + bias + ReLU + fused fc1, strip-mined over 64-row chunks -----
    @pl.loop(0, N_CHUNKS)
    def _(qi):
        q0 = pl.multiple_of(qi * Q_CHUNK, Q_CHUNK)

        # 5x5 conv as 25 sublane-shifted MACs; each shifted view is loaded once
        # and shared by the 3 output channels.  3 x (64,TB) f32 accumulators
        # (24 vregs) + one shifted view (8 vregs) -> no vreg spills.
        accs = [None] * C_OUT
        for di in range(K):
            for dj in range(K):
                t = di * K + dj
                shifted = x_ref[pl.ds(q0 + di * W_IN + dj, Q_CHUNK), :]
                for c in range(C_OUT):
                    if accs[c] is None:
                        # fold the conv bias into the first tap
                        accs[c] = shifted * wcs[c][t] + bcs[c]
                    else:
                        accs[c] = accs[c] + shifted * wcs[c][t]

        # ReLU + bf16 cast (frees the f32 accumulators before the matmuls).
        chunks = [jnp.maximum(a, 0.0).astype(jnp.bfloat16) for a in accs]

        # Fused fc1: accumulate W1_chunk @ relu(conv_chunk) on the MXU.
        part = None
        for c in range(C_OUT):
            w1c = w1_ref[c * N_CHUNKS + qi]        # (HID_PAD, Q_CHUNK) bf16
            p = jnp.dot(w1c, chunks[c], preferred_element_type=jnp.float32)
            part = p if part is None else part + p
        z1_ref[...] += part

    # ---- fc1 ReLU + fc2 ------------------------------------------------------
    z1 = jnp.maximum(z1_ref[...], 0.0)                              # (128, TB)
    o_ref[...] = (jnp.dot(w2_ref[...], z1, preferred_element_type=jnp.float32)
                  + b2_ref[...])


def _prep_inputs(x, params, batch_tile):
    """Host-side re-layout: lane-major batch, per-chunk bf16 fc1 weight, etc."""
    B = x.shape[0]
    Bp = ((B + batch_tile - 1) // batch_tile) * batch_tile

    # images -> flattened columns (Q_IN_PAD, Bp), zero-padded
    xf = x.reshape(B, Q_IN).astype(jnp.float32)
    xf = jnp.pad(xf, ((0, Bp - B), (0, Q_IN_PAD - Q_IN)))
    x_cols = xf.T

    wc_flat = params["wc"].reshape(-1).astype(jnp.float32)      # (75,)
    bc = params["bc"].astype(jnp.float32)                       # (3,)

    # fc1 weight re-laid-out onto the conv's padded 50-wide row grid and split
    # into per-(channel, chunk) slices:
    #   w1_k[c*N_CHUNKS + qi, n, t] = fc1.weight[n, c*46*46 + i*46 + j]
    #     where qi*Q_CHUNK + t = i*50 + j  (zero for j>=46, rows>=2300, n>=120)
    w1 = params["w1"].reshape(HID, C_OUT, H_OUT, W_OUT)
    w1 = jnp.pad(w1, ((0, HID_PAD - HID), (0, 0), (0, 0), (0, W_IN - W_OUT)))
    w1 = w1.reshape(HID_PAD, C_OUT, Q_RAW)
    w1 = jnp.pad(w1, ((0, 0), (0, 0), (0, QPAD - Q_RAW)))
    w1 = w1.reshape(HID_PAD, C_OUT, N_CHUNKS, Q_CHUNK)
    w1_k = (w1.transpose(1, 2, 0, 3)
              .reshape(C_OUT * N_CHUNKS, HID_PAD, Q_CHUNK)
              .astype(jnp.bfloat16))

    b1_k = jnp.pad(params["b1"], (0, HID_PAD - HID)).reshape(HID_PAD, 1)
    b1_k = b1_k.astype(jnp.float32)
    w2_k = jnp.pad(params["w2"], ((0, 0), (0, HID_PAD - HID))).astype(jnp.float32)
    b2_k = params["b2"].reshape(OUT, 1).astype(jnp.float32)
    return Bp, x_cols, wc_flat, bc, w1_k, b1_k, w2_k, b2_k


@functools.partial(jax.jit, static_argnames=("batch_tile",))
def calvis1cnn_forward(x, params, *, batch_tile=128):
    # NOTE(v7x): with batch_tile=128 the batch grid only feeds both TensorCores
    # when B >= 256; for smaller batches one TC idles (nothing cheap to split).
    B = x.shape[0]
    tb = batch_tile
    Bp, x_cols, wc_flat, bc, w1_k, b1_k, w2_k, b2_k = _prep_inputs(
        x, params, tb)

    out_t = pl.pallas_call(
        calvis_fused_kernel,
        out_shape=jax.ShapeDtypeStruct((OUT, Bp), jnp.float32),
        grid=(Bp // tb,),
        in_specs=[
            pl.BlockSpec(memory_space=pltpu.MemorySpace.SMEM),          # conv w
            pl.BlockSpec(memory_space=pltpu.MemorySpace.SMEM),          # conv b
            pl.BlockSpec((Q_IN_PAD, tb), lambda b: (0, b)),             # images
            pl.BlockSpec((C_OUT * N_CHUNKS, HID_PAD, Q_CHUNK),
                         lambda b: (0, 0, 0)),                          # fc1 w (resident)
            pl.BlockSpec((HID_PAD, 1), lambda b: (0, 0)),               # fc1 b
            pl.BlockSpec((OUT, HID_PAD), lambda b: (0, 0)),             # fc2 w
            pl.BlockSpec((OUT, 1), lambda b: (0, 0)),                   # fc2 b
        ],
        out_specs=pl.BlockSpec((OUT, tb), lambda b: (0, b)),
        scratch_shapes=[pltpu.VMEM((HID_PAD, tb), jnp.float32)],        # z1 acc
        compiler_params=pltpu.CompilerParams(
            dimension_semantics=("parallel",),
            # actual footprint ~10 MiB (x tile 1.3 MiB x2, w1 ~3.4 MiB x2,
            # z1/out/biases < 0.3 MiB); 24 MiB leaves margin for internal
            # scratch on every generation (v7x physical VMEM = 64 MiB).
            vmem_limit_bytes=24 << 20,
        ),
    )(wc_flat, bc, x_cols, w1_k, b1_k, w2_k, b2_k)

    return out_t[:, :B].T                                               # (B, 3)


def init_params(key):
    """Deterministic init mimicking PyTorch's uniform(-1/sqrt(fan_in), ...)."""
    ks = jax.random.split(key, 6)

    def unif(k, shape, fan_in):
        bound = 1.0 / jnp.sqrt(jnp.float32(fan_in))
        return jax.random.uniform(k, shape, jnp.float32, -bound, bound)

    return {
        "wc": unif(ks[0], (C_OUT, 1, K, K), K * K),   # conv1.weight
        "bc": unif(ks[1], (C_OUT,), K * K),           # conv1.bias
        "w1": unif(ks[2], (HID, FLAT), FLAT),         # fc1.weight (torch layout)
        "b1": unif(ks[3], (HID,), FLAT),              # fc1.bias
        "w2": unif(ks[4], (OUT, HID), HID),           # fc2.weight (torch layout)
        "b2": unif(ks[5], (OUT,), HID),               # fc2.bias
    }


def reference_forward(x, params):
    """Pure-JAX reference of the same math (conv f32, fc1 in bf16 like the kernel)."""
    conv = jax.lax.conv_general_dilated(
        x, params["wc"], window_strides=(1, 1), padding="VALID",
        dimension_numbers=("NCHW", "OIHW", "NCHW"),
        precision=jax.lax.Precision.HIGHEST)
    conv = jnp.maximum(conv + params["bc"].reshape(1, C_OUT, 1, 1), 0.0)
    h = conv.reshape(x.shape[0], FLAT)
    z1 = jnp.dot(h.astype(jnp.bfloat16), params["w1"].T.astype(jnp.bfloat16),
                 preferred_element_type=jnp.float32) + params["b1"]
    z1 = jnp.maximum(z1, 0.0)
    return (jnp.dot(z1, params["w2"].T, precision=jax.lax.Precision.HIGHEST)
            + params["b2"])


if __name__ == "__main__":
    key = jax.random.PRNGKey(0)
    k_x, k_x2, k_p = jax.random.split(key, 3)
    params = init_params(k_p)

    # Small-batch check (single grid step, padded lanes).
    B = 2
    x = jax.random.normal(k_x, (B, 1, H_IN, W_IN), jnp.float32)
    out = jax.block_until_ready(calvis1cnn_forward(x, params))
    ref = jax.block_until_ready(reference_forward(x, params))
    assert out.shape == (B, OUT), out.shape
    assert bool(jnp.all(jnp.isfinite(out)))
    # fc1 runs in bf16 (matched in the reference); everything else is f32.
    assert jnp.allclose(out, ref, rtol=5e-3, atol=5e-3), (out, ref)

    # Multi-grid-step + batch-padding check (B > batch_tile, not a multiple).
    B2 = 200
    x2 = jax.random.normal(k_x2, (B2, 1, H_IN, W_IN), jnp.float32)
    out2 = jax.block_until_ready(calvis1cnn_forward(x2, params))
    ref2 = jax.block_until_ready(reference_forward(x2, params))
    assert out2.shape == (B2, OUT), out2.shape
    assert bool(jnp.all(jnp.isfinite(out2)))
    assert jnp.allclose(out2, ref2, rtol=5e-3, atol=5e-3)

    print("KERNEL_OK")
</pallas_src>

<mosaic_0001>
module attributes {stable_mosaic.version = 11 : i64} {
  func.func @calvis_fused_kernel(%arg0: i32, %arg1: memref<75xf32, #tpu.memory_space<smem>>, %arg2: memref<3xf32, #tpu.memory_space<smem>>, %arg3: memref<2512x128xf32, #tpu.memory_space<vmem>>, %arg4: memref<108x128x64xbf16, #tpu.memory_space<vmem>>, %arg5: memref<128x1xf32, #tpu.memory_space<vmem>>, %arg6: memref<3x128xf32, #tpu.memory_space<vmem>>, %arg7: memref<3x1xf32, #tpu.memory_space<vmem>>, %arg8: memref<3x128xf32, #tpu.memory_space<vmem>>, %arg9: memref<128x128xf32, #tpu.memory_space<vmem>>) attributes {dimension_semantics = [#tpu.dimension_semantics<parallel>], iteration_bounds = array<i64: 1>, scalar_prefetch = 0 : i64, scratch_operands = 1 : i64, tpu.core_type = #tpu.core_type<tc>, window_params = [{transform_indices = @transform_0, window_bounds = array<i64: 75>}, {transform_indices = @transform_1, window_bounds = array<i64: 3>}, {transform_indices = @transform_2, window_bounds = array<i64: 2512, 128>}, {pipeline_mode = #tpu.pipeline_mode<synchronous>, transform_indices = @transform_3, window_bounds = array<i64: 108, 128, 64>}, {pipeline_mode = #tpu.pipeline_mode<synchronous>, transform_indices = @transform_4, window_bounds = array<i64: 128, 1>}, {pipeline_mode = #tpu.pipeline_mode<synchronous>, transform_indices = @transform_5, window_bounds = array<i64: 3, 128>}, {pipeline_mode = #tpu.pipeline_mode<synchronous>, transform_indices = @transform_6, window_bounds = array<i64: 3, 1>}, {transform_indices = @transform_7, window_bounds = array<i64: 3, 128>}]} {
    %c0 = arith.constant 0 : index
    %0 = memref.load %arg1[%c0] : memref<75xf32, #tpu.memory_space<smem>>
    %c1 = arith.constant 1 : index
    %1 = memref.load %arg1[%c1] : memref<75xf32, #tpu.memory_space<smem>>
    %c2 = arith.constant 2 : index
    %2 = memref.load %arg1[%c2] : memref<75xf32, #tpu.memory_space<smem>>
    %c3 = arith.constant 3 : index
    %3 = memref.load %arg1[%c3] : memref<75xf32, #tpu.memory_space<smem>>
    %c4 = arith.constant 4 : index
    %4 = memref.load %arg1[%c4] : memref<75xf32, #tpu.memory_space<smem>>
    %c5 = arith.constant 5 : index
    %5 = memref.load %arg1[%c5] : memref<75xf32, #tpu.memory_space<smem>>
    %c6 = arith.constant 6 : index
    %6 = memref.load %arg1[%c6] : memref<75xf32, #tpu.memory_space<smem>>
    %c7 = arith.constant 7 : index
    %7 = memref.load %arg1[%c7] : memref<75xf32, #tpu.memory_space<smem>>
    %c8 = arith.constant 8 : index
    %8 = memref.load %arg1[%c8] : memref<75xf32, #tpu.memory_space<smem>>
    %c9 = arith.constant 9 : index
    %9 = memref.load %arg1[%c9] : memref<75xf32, #tpu.memory_space<smem>>
    %c10 = arith.constant 10 : index
    %10 = memref.load %arg1[%c10] : memref<75xf32, #tpu.memory_space<smem>>
    %c11 = arith.constant 11 : index
    %11 = memref.load %arg1[%c11] : memref<75xf32, #tpu.memory_space<smem>>
    %c12 = arith.constant 12 : index
    %12 = memref.load %arg1[%c12] : memref<75xf32, #tpu.memory_space<smem>>
    %c13 = arith.constant 13 : index
    %13 = memref.load %arg1[%c13] : memref<75xf32, #tpu.memory_space<smem>>
    %c14 = arith.constant 14 : index
    %14 = memref.load %arg1[%c14] : memref<75xf32, #tpu.memory_space<smem>>
    %c15 = arith.constant 15 : index
    %15 = memref.load %arg1[%c15] : memref<75xf32, #tpu.memory_space<smem>>
    %c16 = arith.constant 16 : index
    %16 = memref.load %arg1[%c16] : memref<75xf32, #tpu.memory_space<smem>>
    %c17 = arith.constant 17 : index
    %17 = memref.load %arg1[%c17] : memref<75xf32, #tpu.memory_space<smem>>
    %c18 = arith.constant 18 : index
    %18 = memref.load %arg1[%c18] : memref<75xf32, #tpu.memory_space<smem>>
    %c19 = arith.constant 19 : index
    %19 = memref.load %arg1[%c19] : memref<75xf32, #tpu.memory_space<smem>>
    %c20 = arith.constant 20 : index
    %20 = memref.load %arg1[%c20] : memref<75xf32, #tpu.memory_space<smem>>
    %c21 = arith.constant 21 : index
    %21 = memref.load %arg1[%c21] : memref<75xf32, #tpu.memory_space<smem>>
    %c22 = arith.constant 22 : index
    %22 = memref.load %arg1[%c22] : memref<75xf32, #tpu.memory_space<smem>>
    %c23 = arith.constant 23 : index
    %23 = memref.load %arg1[%c23] : memref<75xf32, #tpu.memory_space<smem>>
    %c24 = arith.constant 24 : index
    %24 = memref.load %arg1[%c24] : memref<75xf32, #tpu.memory_space<smem>>
    %c25 = arith.constant 25 : index
    %25 = memref.load %arg1[%c25] : memref<75xf32, #tpu.memory_space<smem>>
    %c26 = arith.constant 26 : index
    %26 = memref.load %arg1[%c26] : memref<75xf32, #tpu.memory_space<smem>>
    %c27 = arith.constant 27 : index
    %27 = memref.load %arg1[%c27] : memref<75xf32, #tpu.memory_space<smem>>
    %c28 = arith.constant 28 : index
    %28 = memref.load %arg1[%c28] : memref<75xf32, #tpu.memory_space<smem>>
    %c29 = arith.constant 29 : index
    %29 = memref.load %arg1[%c29] : memref<75xf32, #tpu.memory_space<smem>>
    %c30 = arith.constant 30 : index
    %30 = memref.load %arg1[%c30] : memref<75xf32, #tpu.memory_space<smem>>
    %c31 = arith.constant 31 : index
    %31 = memref.load %arg1[%c31] : memref<75xf32, #tpu.memory_space<smem>>
    %c32 = arith.constant 32 : index
    %32 = memref.load %arg1[%c32] : memref<75xf32, #tpu.memory_space<smem>>
    %c33 = arith.constant 33 : index
    %33 = memref.load %arg1[%c33] : memref<75xf32, #tpu.memory_space<smem>>
    %c34 = arith.constant 34 : index
    %34 = memref.load %arg1[%c34] : memref<75xf32, #tpu.memory_space<smem>>
    %c35 = arith.constant 35 : index
    %35 = memref.load %arg1[%c35] : memref<75xf32, #tpu.memory_space<smem>>
    %c36 = arith.constant 36 : index
    %36 = memref.load %arg1[%c36] : memref<75xf32, #tpu.memory_space<smem>>
    %c37 = arith.constant 37 : index
    %37 = memref.load %arg1[%c37] : memref<75xf32, #tpu.memory_space<smem>>
    %c38 = arith.constant 38 : index
    %38 = memref.load %arg1[%c38] : memref<75xf32, #tpu.memory_space<smem>>
    %c39 = arith.constant 39 : index
    %39 = memref.load %arg1[%c39] : memref<75xf32, #tpu.memory_space<smem>>
    %c40 = arith.constant 40 : index
    %40 = memref.load %arg1[%c40] : memref<75xf32, #tpu.memory_space<smem>>
    %c41 = arith.constant 41 : index
    %41 = memref.load %arg1[%c41] : memref<75xf32, #tpu.memory_space<smem>>
    %c42 = arith.constant 42 : index
    %42 = memref.load %arg1[%c42] : memref<75xf32, #tpu.memory_space<smem>>
    %c43 = arith.constant 43 : index
    %43 = memref.load %arg1[%c43] : memref<75xf32, #tpu.memory_space<smem>>
    %c44 = arith.constant 44 : index
    %44 = memref.load %arg1[%c44] : memref<75xf32, #tpu.memory_space<smem>>
    %c45 = arith.constant 45 : index
    %45 = memref.load %arg1[%c45] : memref<75xf32, #tpu.memory_space<smem>>
    %c46 = arith.constant 46 : index
    %46 = memref.load %arg1[%c46] : memref<75xf32, #tpu.memory_space<smem>>
    %c47 = arith.constant 47 : index
    %47 = memref.load %arg1[%c47] : memref<75xf32, #tpu.memory_space<smem>>
    %c48 = arith.constant 48 : index
    %48 = memref.load %arg1[%c48] : memref<75xf32, #tpu.memory_space<smem>>
    %c49 = arith.constant 49 : index
    %49 = memref.load %arg1[%c49] : memref<75xf32, #tpu.memory_space<smem>>
    %c50 = arith.constant 50 : index
    %50 = memref.load %arg1[%c50] : memref<75xf32, #tpu.memory_space<smem>>
    %c51 = arith.constant 51 : index
    %51 = memref.load %arg1[%c51] : memref<75xf32, #tpu.memory_space<smem>>
    %c52 = arith.constant 52 : index
    %52 = memref.load %arg1[%c52] : memref<75xf32, #tpu.memory_space<smem>>
    %c53 = arith.constant 53 : index
    %53 = memref.load %arg1[%c53] : memref<75xf32, #tpu.memory_space<smem>>
    %c54 = arith.constant 54 : index
    %54 = memref.load %arg1[%c54] : memref<75xf32, #tpu.memory_space<smem>>
    %c55 = arith.constant 55 : index
    %55 = memref.load %arg1[%c55] : memref<75xf32, #tpu.memory_space<smem>>
    %c56 = arith.constant 56 : index
    %56 = memref.load %arg1[%c56] : memref<75xf32, #tpu.memory_space<smem>>
    %c57 = arith.constant 57 : index
    %57 = memref.load %arg1[%c57] : memref<75xf32, #tpu.memory_space<smem>>
    %c58 = arith.constant 58 : index
    %58 = memref.load %arg1[%c58] : memref<75xf32, #tpu.memory_space<smem>>
    %c59 = arith.constant 59 : index
    %59 = memref.load %arg1[%c59] : memref<75xf32, #tpu.memory_space<smem>>
    %c60 = arith.constant 60 : index
    %60 = memref.load %arg1[%c60] : memref<75xf32, #tpu.memory_space<smem>>
    %c61 = arith.constant 61 : index
    %61 = memref.load %arg1[%c61] : memref<75xf32, #tpu.memory_space<smem>>
    %c62 = arith.constant 62 : index
    %62 = memref.load %arg1[%c62] : memref<75xf32, #tpu.memory_space<smem>>
    %c63 = arith.constant 63 : index
    %63 = memref.load %arg1[%c63] : memref<75xf32, #tpu.memory_space<smem>>
    %c64 = arith.constant 64 : index
    %64 = memref.load %arg1[%c64] : memref<75xf32, #tpu.memory_space<smem>>
    %c65 = arith.constant 65 : index
    %65 = memref.load %arg1[%c65] : memref<75xf32, #tpu.memory_space<smem>>
    %c66 = arith.constant 66 : index
    %66 = memref.load %arg1[%c66] : memref<75xf32, #tpu.memory_space<smem>>
    %c67 = arith.constant 67 : index
    %67 = memref.load %arg1[%c67] : memref<75xf32, #tpu.memory_space<smem>>
    %c68 = arith.constant 68 : index
    %68 = memref.load %arg1[%c68] : memref<75xf32, #tpu.memory_space<smem>>
    %c69 = arith.constant 69 : index
    %69 = memref.load %arg1[%c69] : memref<75xf32, #tpu.memory_space<smem>>
    %c70 = arith.constant 70 : index
    %70 = memref.load %arg1[%c70] : memref<75xf32, #tpu.memory_space<smem>>
    %c71 = arith.constant 71 : index
    %71 = memref.load %arg1[%c71] : memref<75xf32, #tpu.memory_space<smem>>
    %c72 = arith.constant 72 : index
    %72 = memref.load %arg1[%c72] : memref<75xf32, #tpu.memory_space<smem>>
    %c73 = arith.constant 73 : index
    %73 = memref.load %arg1[%c73] : memref<75xf32, #tpu.memory_space<smem>>
    %c74 = arith.constant 74 : index
    %74 = memref.load %arg1[%c74] : memref<75xf32, #tpu.memory_space<smem>>
    %c0_0 = arith.constant 0 : index
    %75 = memref.load %arg2[%c0_0] : memref<3xf32, #tpu.memory_space<smem>>
    %c1_1 = arith.constant 1 : index
    %76 = memref.load %arg2[%c1_1] : memref<3xf32, #tpu.memory_space<smem>>
    %c2_2 = arith.constant 2 : index
    %77 = memref.load %arg2[%c2_2] : memref<3xf32, #tpu.memory_space<smem>>
    %c0_3 = arith.constant 0 : index
    %c0_4 = arith.constant 0 : index
    %78 = vector.load %arg5[%c0_3, %c0_4] : memref<128x1xf32, #tpu.memory_space<vmem>>, vector<128x1xf32>
    %79 = vector.shape_cast %78 : vector<128x1xf32> to vector<128x1xf32>
    %80 = vector.broadcast %79 : vector<128x1xf32> to vector<128x128xf32>
    %c0_5 = arith.constant 0 : index
    %c0_6 = arith.constant 0 : index
    %81 = vector.load %arg9[%c0_5, %c0_6] : memref<128x128xf32, #tpu.memory_space<vmem>>, vector<128x128xf32>
    tpu.vector_store %arg9[%c0_5, %c0_6], %80 {strides = array<i32>} : memref<128x128xf32, #tpu.memory_space<vmem>>, vector<128x128xf32>,
    %c0_i32 = arith.constant 0 : i32
    %c36_i32 = arith.constant 36 : i32
    %82 = arith.addi %c0_i32, %c36_i32 : i32
    %c1_i32 = arith.constant 1 : i32
    scf.for %arg10 = %c0_i32 to %82 step %c1_i32  : i32 {
      %c1_i32_17 = arith.constant 1 : i32
      %92 = arith.muli %arg10, %c1_i32_17 : i32
      %c0_i32_18 = arith.constant 0 : i32
      %93 = arith.addi %c0_i32_18, %92 : i32
      %c64_i32 = arith.constant 64 : i32
      %94 = arith.muli %93, %c64_i32 : i32
      %95 = tpu.assume_multiple %94, 64 : i32
      %c0_i32_19 = arith.constant 0 : i32
      %96 = arith.addi %95, %c0_i32_19 : i32
      %c0_i32_20 = arith.constant 0 : i32
      %97 = arith.addi %96, %c0_i32_20 : i32
      %98 = arith.index_cast %97 : i32 to index
      %c0_21 = arith.constant 0 : index
      %99 = vector.load %arg3[%98, %c0_21] : memref<2512x128xf32, #tpu.memory_space<vmem>>, vector<64x128xf32>
      %100 = vector.broadcast %0 : f32 to vector<64x128xf32>
      %101 = arith.mulf %99, %100 : vector<64x128xf32>
      %102 = vector.broadcast %75 : f32 to vector<64x128xf32>
      %103 = arith.addf %101, %102 : vector<64x128xf32>
      %104 = vector.broadcast %25 : f32 to vector<64x128xf32>
      %105 = arith.mulf %99, %104 : vector<64x128xf32>
      %106 = vector.broadcast %76 : f32 to vector<64x128xf32>
      %107 = arith.addf %105, %106 : vector<64x128xf32>
      %108 = vector.broadcast %50 : f32 to vector<64x128xf32>
      %109 = arith.mulf %99, %108 : vector<64x128xf32>
      %110 = vector.broadcast %77 : f32 to vector<64x128xf32>
      %111 = arith.addf %109, %110 : vector<64x128xf32>
      %c0_i32_22 = arith.constant 0 : i32
      %112 = arith.addi %95, %c0_i32_22 : i32
      %c1_i32_23 = arith.constant 1 : i32
      %113 = arith.addi %112, %c1_i32_23 : i32
      %114 = arith.index_cast %113 : i32 to index
      %c0_24 = arith.constant 0 : index
      %115 = vector.load %arg3[%114, %c0_24] : memref<2512x128xf32, #tpu.memory_space<vmem>>, vector<64x128xf32>
      %116 = vector.broadcast %1 : f32 to vector<64x128xf32>
      %117 = arith.mulf %115, %116 : vector<64x128xf32>
      %118 = arith.addf %103, %117 : vector<64x128xf32>
      %119 = vector.broadcast %26 : f32 to vector<64x128xf32>
      %120 = arith.mulf %115, %119 : vector<64x128xf32>
      %121 = arith.addf %107, %120 : vector<64x128xf32>
      %122 = vector.broadcast %51 : f32 to vector<64x128xf32>
      %123 = arith.mulf %115, %122 : vector<64x128xf32>
      %124 = arith.addf %111, %123 : vector<64x128xf32>
      %c0_i32_25 = arith.constant 0 : i32
      %125 = arith.addi %95, %c0_i32_25 : i32
      %c2_i32 = arith.constant 2 : i32
      %126 = arith.addi %125, %c2_i32 : i32
      %127 = arith.index_cast %126 : i32 to index
      %c0_26 = arith.constant 0 : index
      %128 = vector.load %arg3[%127, %c0_26] : memref<2512x128xf32, #tpu.memory_space<vmem>>, vector<64x128xf32>
      %129 = vector.broadcast %2 : f32 to vector<64x128xf32>
      %130 = arith.mulf %128, %129 : vector<64x128xf32>
      %131 = arith.addf %118, %130 : vector<64x128xf32>
      %132 = vector.broadcast %27 : f32 to vector<64x128xf32>
      %133 = arith.mulf %128, %132 : vector<64x128xf32>
      %134 = arith.addf %121, %133 : vector<64x128xf32>
      %135 = vector.broadcast %52 : f32 to vector<64x128xf32>
      %136 = arith.mulf %128, %135 : vector<64x128xf32>
      %137 = arith.addf %124, %136 : vector<64x128xf32>
      %c0_i32_27 = arith.constant 0 : i32
      %138 = arith.addi %95, %c0_i32_27 : i32
      %c3_i32 = arith.constant 3 : i32
      %139 = arith.addi %138, %c3_i32 : i32
      %140 = arith.index_cast %139 : i32 to index
      %c0_28 = arith.constant 0 : index
      %141 = vector.load %arg3[%140, %c0_28] : memref<2512x128xf32, #tpu.memory_space<vmem>>, vector<64x128xf32>
      %142 = vector.broadcast %3 : f32 to vector<64x128xf32>
      %143 = arith.mulf %141, %142 : vector<64x128xf32>
      %144 = arith.addf %131, %143 : vector<64x128xf32>
      %145 = vector.broadcast %28 : f32 to vector<64x128xf32>
      %146 = arith.mulf %141, %145 : vector<64x128xf32>
      %147 = arith.addf %134, %146 : vector<64x128xf32>
      %148 = vector.broadcast %53 : f32 to vector<64x128xf32>
      %149 = arith.mulf %141, %148 : vector<64x128xf32>
      %150 = arith.addf %137, %149 : vector<64x128xf32>
      %c0_i32_29 = arith.constant 0 : i32
      %151 = arith.addi %95, %c0_i32_29 : i32
      %c4_i32 = arith.constant 4 : i32
      %152 = arith.addi %151, %c4_i32 : i32
      %153 = arith.index_cast %152 : i32 to index
      %c0_30 = arith.constant 0 : index
      %154 = vector.load %arg3[%153, %c0_30] : memref<2512x128xf32, #tpu.memory_space<vmem>>, vector<64x128xf32>
      %155 = vector.broadcast %4 : f32 to vector<64x128xf32>
      %156 = arith.mulf %154, %155 : vector<64x128xf32>
      %157 = arith.addf %144, %156 : vector<64x128xf32>
      %158 = vector.broadcast %29 : f32 to vector<64x128xf32>
      %159 = arith.mulf %154, %158 : vector<64x128xf32>
      %160 = arith.addf %147, %159 : vector<64x128xf32>
      %161 = vector.broadcast %54 : f32 to vector<64x128xf32>
      %162 = arith.mulf %154, %161 : vector<64x128xf32>
      %163 = arith.addf %150, %162 : vector<64x128xf32>
      %c50_i32 = arith.constant 50 : i32
      %164 = arith.addi %95, %c50_i32 : i32
      %c0_i32_31 = arith.constant 0 : i32
      %165 = arith.addi %164, %c0_i32_31 : i32
      %166 = arith.index_cast %165 : i32 to index
      %c0_32 = arith.constant 0 : index
      %167 = vector.load %arg3[%166, %c0_32] : memref<2512x128xf32, #tpu.memory_space<vmem>>, vector<64x128xf32>
      %168 = vector.broadcast %5 : f32 to vector<64x128xf32>
      %169 = arith.mulf %167, %168 : vector<64x128xf32>
      %170 = arith.addf %157, %169 : vector<64x128xf32>
      %171 = vector.broadcast %30 : f32 to vector<64x128xf32>
      %172 = arith.mulf %167, %171 : vector<64x128xf32>
      %173 = arith.addf %160, %172 : vector<64x128xf32>
      %174 = vector.broadcast %55 : f32 to vector<64x128xf32>
      %175 = arith.mulf %167, %174 : vector<64x128xf32>
      %176 = arith.addf %163, %175 : vector<64x128xf32>
      %c50_i32_33 = arith.constant 50 : i32
      %177 = arith.addi %95, %c50_i32_33 : i32
      %c1_i32_34 = arith.constant 1 : i32
      %178 = arith.addi %177, %c1_i32_34 : i32
      %179 = arith.index_cast %178 : i32 to index
      %c0_35 = arith.constant 0 : index
      %180 = vector.load %arg3[%179, %c0_35] : memref<2512x128xf32, #tpu.memory_space<vmem>>, vector<64x128xf32>
      %181 = vector.broadcast %6 : f32 to vector<64x128xf32>
      %182 = arith.mulf %180, %181 : vector<64x128xf32>
      %183 = arith.addf %170, %182 : vector<64x128xf32>
      %184 = vector.broadcast %31 : f32 to vector<64x128xf32>
      %185 = arith.mulf %180, %184 : vector<64x128xf32>
      %186 = arith.addf %173, %185 : vector<64x128xf32>
      %187 = vector.broadcast %56 : f32 to vector<64x128xf32>
      %188 = arith.mulf %180, %187 : vector<64x128xf32>
      %189 = arith.addf %176, %188 : vector<64x128xf32>
      %c50_i32_36 = arith.constant 50 : i32
      %190 = arith.addi %95, %c50_i32_36 : i32
      %c2_i32_37 = arith.constant 2 : i32
      %191 = arith.addi %190, %c2_i32_37 : i32
      %192 = arith.index_cast %191 : i32 to index
      %c0_38 = arith.constant 0 : index
      %193 = vector.load %arg3[%192, %c0_38] : memref<2512x128xf32, #tpu.memory_space<vmem>>, vector<64x128xf32>
      %194 = vector.broadcast %7 : f32 to vector<64x128xf32>
      %195 = arith.mulf %193, %194 : vector<64x128xf32>
      %196 = arith.addf %183, %195 : vector<64x128xf32>
      %197 = vector.broadcast %32 : f32 to vector<64x128xf32>
      %198 = arith.mulf %193, %197 : vector<64x128xf32>
      %199 = arith.addf %186, %198 : vector<64x128xf32>
      %200 = vector.broadcast %57 : f32 to vector<64x128xf32>
      %201 = arith.mulf %193, %200 : vector<64x128xf32>
      %202 = arith.addf %189, %201 : vector<64x128xf32>
      %c50_i32_39 = arith.constant 50 : i32
      %203 = arith.addi %95, %c50_i32_39 : i32
      %c3_i32_40 = arith.constant 3 : i32
      %204 = arith.addi %203, %c3_i32_40 : i32
      %205 = arith.index_cast %204 : i32 to index
      %c0_41 = arith.constant 0 : index
      %206 = vector.load %arg3[%205, %c0_41] : memref<2512x128xf32, #tpu.memory_space<vmem>>, vector<64x128xf32>
      %207 = vector.broadcast %8 : f32 to vector<64x128xf32>
      %208 = arith.mulf %206, %207 : vector<64x128xf32>
      %209 = arith.addf %196, %208 : vector<64x128xf32>
      %210 = vector.broadcast %33 : f32 to vector<64x128xf32>
      %211 = arith.mulf %206, %210 : vector<64x128xf32>
      %212 = arith.addf %199, %211 : vector<64x128xf32>
      %213 = vector.broadcast %58 : f32 to vector<64x128xf32>
      %214 = arith.mulf %206, %213 : vector<64x128xf32>
      %215 = arith.addf %202, %214 : vector<64x128xf32>
      %c50_i32_42 = arith.constant 50 : i32
      %216 = arith.addi %95, %c50_i32_42 : i32
      %c4_i32_43 = arith.constant 4 : i32
      %217 = arith.addi %216, %c4_i32_43 : i32
      %218 = arith.index_cast %217 : i32 to index
      %c0_44 = arith.constant 0 : index
      %219 = vector.load %arg3[%218, %c0_44] : memref<2512x128xf32, #tpu.memory_space<vmem>>, vector<64x128xf32>
      %220 = vector.broadcast %9 : f32 to vector<64x128xf32>
      %221 = arith.mulf %219, %220 : vector<64x128xf32>
      %222 = arith.addf %209, %221 : vector<64x128xf32>
      %223 = vector.broadcast %34 : f32 to vector<64x128xf32>
      %224 = arith.mulf %219, %223 : vector<64x128xf32>
      %225 = arith.addf %212, %224 : vector<64x128xf32>
      %226 = vector.broadcast %59 : f32 to vector<64x128xf32>
      %227 = arith.mulf %219, %226 : vector<64x128xf32>
      %228 = arith.addf %215, %227 : vector<64x128xf32>
      %c100_i32 = arith.constant 100 : i32
      %229 = arith.addi %95, %c100_i32 : i32
      %c0_i32_45 = arith.constant 0 : i32
      %230 = arith.addi %229, %c0_i32_45 : i32
      %231 = arith.index_cast %230 : i32 to index
      %c0_46 = arith.constant 0 : index
      %232 = vector.load %arg3[%231, %c0_46] : memref<2512x128xf32, #tpu.memory_space<vmem>>, vector<64x128xf32>
      %233 = vector.broadcast %10 : f32 to vector<64x128xf32>
      %234 = arith.mulf %232, %233 : vector<64x128xf32>
      %235 = arith.addf %222, %234 : vector<64x128xf32>
      %236 = vector.broadcast %35 : f32 to vector<64x128xf32>
      %237 = arith.mulf %232, %236 : vector<64x128xf32>
      %238 = arith.addf %225, %237 : vector<64x128xf32>
      %239 = vector.broadcast %60 : f32 to vector<64x128xf32>
      %240 = arith.mulf %232, %239 : vector<64x128xf32>
      %241 = arith.addf %228, %240 : vector<64x128xf32>
      %c100_i32_47 = arith.constant 100 : i32
      %242 = arith.addi %95, %c100_i32_47 : i32
      %c1_i32_48 = arith.constant 1 : i32
      %243 = arith.addi %242, %c1_i32_48 : i32
      %244 = arith.index_cast %243 : i32 to index
      %c0_49 = arith.constant 0 : index
      %245 = vector.load %arg3[%244, %c0_49] : memref<2512x128xf32, #tpu.memory_space<vmem>>, vector<64x128xf32>
      %246 = vector.broadcast %11 : f32 to vector<64x128xf32>
      %247 = arith.mulf %245, %246 : vector<64x128xf32>
      %248 = arith.addf %235, %247 : vector<64x128xf32>
      %249 = vector.broadcast %36 : f32 to vector<64x128xf32>
      %250 = arith.mulf %245, %249 : vector<64x128xf32>
      %251 = arith.addf %238, %250 : vector<64x128xf32>
      %252 = vector.broadcast %61 : f32 to vector<64x128xf32>
      %253 = arith.mulf %245, %252 : vector<64x128xf32>
      %254 = arith.addf %241, %253 : vector<64x128xf32>
      %c100_i32_50 = arith.constant 100 : i32
      %255 = arith.addi %95, %c100_i32_50 : i32
      %c2_i32_51 = arith.constant 2 : i32
      %256 = arith.addi %255, %c2_i32_51 : i32
      %257 = arith.index_cast %256 : i32 to index
      %c0_52 = arith.constant 0 : index
      %258 = vector.load %arg3[%257, %c0_52] : memref<2512x128xf32, #tpu.memory_space<vmem>>, vector<64x128xf32>
      %259 = vector.broadcast %12 : f32 to vector<64x128xf32>
      %260 = arith.mulf %258, %259 : vector<64x128xf32>
      %261 = arith.addf %248, %260 : vector<64x128xf32>
      %262 = vector.broadcast %37 : f32 to vector<64x128xf32>
      %263 = arith.mulf %258, %262 : vector<64x128xf32>
      %264 = arith.addf %251, %263 : vector<64x128xf32>
      %265 = vector.broadcast %62 : f32 to vector<64x128xf32>
      %266 = arith.mulf %258, %265 : vector<64x128xf32>
      %267 = arith.addf %254, %266 : vector<64x128xf32>
      %c100_i32_53 = arith.constant 100 : i32
      %268 = arith.addi %95, %c100_i32_53 : i32
      %c3_i32_54 = arith.constant 3 : i32
      %269 = arith.addi %268, %c3_i32_54 : i32
      %270 = arith.index_cast %269 : i32 to index
      %c0_55 = arith.constant 0 : index
      %271 = vector.load %arg3[%270, %c0_55] : memref<2512x128xf32, #tpu.memory_space<vmem>>, vector<64x128xf32>
      %272 = vector.broadcast %13 : f32 to vector<64x128xf32>
      %273 = arith.mulf %271, %272 : vector<64x128xf32>
      %274 = arith.addf %261, %273 : vector<64x128xf32>
      %275 = vector.broadcast %38 : f32 to vector<64x128xf32>
      %276 = arith.mulf %271, %275 : vector<64x128xf32>
      %277 = arith.addf %264, %276 : vector<64x128xf32>
      %278 = vector.broadcast %63 : f32 to vector<64x128xf32>
      %279 = arith.mulf %271, %278 : vector<64x128xf32>
      %280 = arith.addf %267, %279 : vector<64x128xf32>
      %c100_i32_56 = arith.constant 100 : i32
      %281 = arith.addi %95, %c100_i32_56 : i32
      %c4_i32_57 = arith.constant 4 : i32
      %282 = arith.addi %281, %c4_i32_57 : i32
      %283 = arith.index_cast %282 : i32 to index
      %c0_58 = arith.constant 0 : index
      %284 = vector.load %arg3[%283, %c0_58] : memref<2512x128xf32, #tpu.memory_space<vmem>>, vector<64x128xf32>
      %285 = vector.broadcast %14 : f32 to vector<64x128xf32>
      %286 = arith.mulf %284, %285 : vector<64x128xf32>
      %287 = arith.addf %274, %286 : vector<64x128xf32>
      %288 = vector.broadcast %39 : f32 to vector<64x128xf32>
      %289 = arith.mulf %284, %288 : vector<64x128xf32>
      %290 = arith.addf %277, %289 : vector<64x128xf32>
      %291 = vector.broadcast %64 : f32 to vector<64x128xf32>
      %292 = arith.mulf %284, %291 : vector<64x128xf32>
      %293 = arith.addf %280, %292 : vector<64x128xf32>
      %c150_i32 = arith.constant 150 : i32
      %294 = arith.addi %95, %c150_i32 : i32
      %c0_i32_59 = arith.constant 0 : i32
      %295 = arith.addi %294, %c0_i32_59 : i32
      %296 = arith.index_cast %295 : i32 to index
      %c0_60 = arith.constant 0 : index
      %297 = vector.load %arg3[%296, %c0_60] : memref<2512x128xf32, #tpu.memory_space<vmem>>, vector<64x128xf32>
      %298 = vector.broadcast %15 : f32 to vector<64x128xf32>
      %299 = arith.mulf %297, %298 : vector<64x128xf32>
      %300 = arith.addf %287, %299 : vector<64x128xf32>
      %301 = vector.broadcast %40 : f32 to vector<64x128xf32>
      %302 = arith.mulf %297, %301 : vector<64x128xf32>
      %303 = arith.addf %290, %302 : vector<64x128xf32>
      %304 = vector.broadcast %65 : f32 to vector<64x128xf32>
      %305 = arith.mulf %297, %304 : vector<64x128xf32>
      %306 = arith.addf %293, %305 : vector<64x128xf32>
      %c150_i32_61 = arith.constant 150 : i32
      %307 = arith.addi %95, %c150_i32_61 : i32
      %c1_i32_62 = arith.constant 1 : i32
      %308 = arith.addi %307, %c1_i32_62 : i32
      %309 = arith.index_cast %308 : i32 to index
      %c0_63 = arith.constant 0 : index
      %310 = vector.load %arg3[%309, %c0_63] : memref<2512x128xf32, #tpu.memory_space<vmem>>, vector<64x128xf32>
      %311 = vector.broadcast %16 : f32 to vector<64x128xf32>
      %312 = arith.mulf %310, %311 : vector<64x128xf32>
      %313 = arith.addf %300, %312 : vector<64x128xf32>
      %314 = vector.broadcast %41 : f32 to vector<64x128xf32>
      %315 = arith.mulf %310, %314 : vector<64x128xf32>
      %316 = arith.addf %303, %315 : vector<64x128xf32>
      %317 = vector.broadcast %66 : f32 to vector<64x128xf32>
      %318 = arith.mulf %310, %317 : vector<64x128xf32>
      %319 = arith.addf %306, %318 : vector<64x128xf32>
      %c150_i32_64 = arith.constant 150 : i32
      %320 = arith.addi %95, %c150_i32_64 : i32
      %c2_i32_65 = arith.constant 2 : i32
      %321 = arith.addi %320, %c2_i32_65 : i32
      %322 = arith.index_cast %321 : i32 to index
      %c0_66 = arith.constant 0 : index
      %323 = vector.load %arg3[%322, %c0_66] : memref<2512x128xf32, #tpu.memory_space<vmem>>, vector<64x128xf32>
      %324 = vector.broadcast %17 : f32 to vector<64x128xf32>
      %325 = arith.mulf %323, %324 : vector<64x128xf32>
      %326 = arith.addf %313, %325 : vector<64x128xf32>
      %327 = vector.broadcast %42 : f32 to vector<64x128xf32>
      %328 = arith.mulf %323, %327 : vector<64x128xf32>
      %329 = arith.addf %316, %328 : vector<64x128xf32>
      %330 = vector.broadcast %67 : f32 to vector<64x128xf32>
      %331 = arith.mulf %323, %330 : vector<64x128xf32>
      %332 = arith.addf %319, %331 : vector<64x128xf32>
      %c150_i32_67 = arith.constant 150 : i32
      %333 = arith.addi %95, %c150_i32_67 : i32
      %c3_i32_68 = arith.constant 3 : i32
      %334 = arith.addi %333, %c3_i32_68 : i32
      %335 = arith.index_cast %334 : i32 to index
      %c0_69 = arith.constant 0 : index
      %336 = vector.load %arg3[%335, %c0_69] : memref<2512x128xf32, #tpu.memory_space<vmem>>, vector<64x128xf32>
      %337 = vector.broadcast %18 : f32 to vector<64x128xf32>
      %338 = arith.mulf %336, %337 : vector<64x128xf32>
      %339 = arith.addf %326, %338 : vector<64x128xf32>
      %340 = vector.broadcast %43 : f32 to vector<64x128xf32>
      %341 = arith.mulf %336, %340 : vector<64x128xf32>
      %342 = arith.addf %329, %341 : vector<64x128xf32>
      %343 = vector.broadcast %68 : f32 to vector<64x128xf32>
      %344 = arith.mulf %336, %343 : vector<64x128xf32>
      %345 = arith.addf %332, %344 : vector<64x128xf32>
      %c150_i32_70 = arith.constant 150 : i32
      %346 = arith.addi %95, %c150_i32_70 : i32
      %c4_i32_71 = arith.constant 4 : i32
      %347 = arith.addi %346, %c4_i32_71 : i32
      %348 = arith.index_cast %347 : i32 to index
      %c0_72 = arith.constant 0 : index
      %349 = vector.load %arg3[%348, %c0_72] : memref<2512x128xf32, #tpu.memory_space<vmem>>, vector<64x128xf32>
      %350 = vector.broadcast %19 : f32 to vector<64x128xf32>
      %351 = arith.mulf %349, %350 : vector<64x128xf32>
      %352 = arith.addf %339, %351 : vector<64x128xf32>
      %353 = vector.broadcast %44 : f32 to vector<64x128xf32>
      %354 = arith.mulf %349, %353 : vector<64x128xf32>
      %355 = arith.addf %342, %354 : vector<64x128xf32>
      %356 = vector.broadcast %69 : f32 to vector<64x128xf32>
      %357 = arith.mulf %349, %356 : vector<64x128xf32>
      %358 = arith.addf %345, %357 : vector<64x128xf32>
      %c200_i32 = arith.constant 200 : i32
      %359 = arith.addi %95, %c200_i32 : i32
      %c0_i32_73 = arith.constant 0 : i32
      %360 = arith.addi %359, %c0_i32_73 : i32
      %361 = arith.index_cast %360 : i32 to index
      %c0_74 = arith.constant 0 : index
      %362 = vector.load %arg3[%361, %c0_74] : memref<2512x128xf32, #tpu.memory_space<vmem>>, vector<64x128xf32>
      %363 = vector.broadcast %20 : f32 to vector<64x128xf32>
      %364 = arith.mulf %362, %363 : vector<64x128xf32>
      %365 = arith.addf %352, %364 : vector<64x128xf32>
      %366 = vector.broadcast %45 : f32 to vector<64x128xf32>
      %367 = arith.mulf %362, %366 : vector<64x128xf32>
      %368 = arith.addf %355, %367 : vector<64x128xf32>
      %369 = vector.broadcast %70 : f32 to vector<64x128xf32>
      %370 = arith.mulf %362, %369 : vector<64x128xf32>
      %371 = arith.addf %358, %370 : vector<64x128xf32>
      %c200_i32_75 = arith.constant 200 : i32
      %372 = arith.addi %95, %c200_i32_75 : i32
      %c1_i32_76 = arith.constant 1 : i32
      %373 = arith.addi %372, %c1_i32_76 : i32
      %374 = arith.index_cast %373 : i32 to index
      %c0_77 = arith.constant 0 : index
      %375 = vector.load %arg3[%374, %c0_77] : memref<2512x128xf32, #tpu.memory_space<vmem>>, vector<64x128xf32>
      %376 = vector.broadcast %21 : f32 to vector<64x128xf32>
      %377 = arith.mulf %375, %376 : vector<64x128xf32>
      %378 = arith.addf %365, %377 : vector<64x128xf32>
      %379 = vector.broadcast %46 : f32 to vector<64x128xf32>
      %380 = arith.mulf %375, %379 : vector<64x128xf32>
      %381 = arith.addf %368, %380 : vector<64x128xf32>
      %382 = vector.broadcast %71 : f32 to vector<64x128xf32>
      %383 = arith.mulf %375, %382 : vector<64x128xf32>
      %384 = arith.addf %371, %383 : vector<64x128xf32>
      %c200_i32_78 = arith.constant 200 : i32
      %385 = arith.addi %95, %c200_i32_78 : i32
      %c2_i32_79 = arith.constant 2 : i32
      %386 = arith.addi %385, %c2_i32_79 : i32
      %387 = arith.index_cast %386 : i32 to index
      %c0_80 = arith.constant 0 : index
      %388 = vector.load %arg3[%387, %c0_80] : memref<2512x128xf32, #tpu.memory_space<vmem>>, vector<64x128xf32>
      %389 = vector.broadcast %22 : f32 to vector<64x128xf32>
      %390 = arith.mulf %388, %389 : vector<64x128xf32>
      %391 = arith.addf %378, %390 : vector<64x128xf32>
      %392 = vector.broadcast %47 : f32 to vector<64x128xf32>
      %393 = arith.mulf %388, %392 : vector<64x128xf32>
      %394 = arith.addf %381, %393 : vector<64x128xf32>
      %395 = vector.broadcast %72 : f32 to vector<64x128xf32>
      %396 = arith.mulf %388, %395 : vector<64x128xf32>
      %397 = arith.addf %384, %396 : vector<64x128xf32>
      %c200_i32_81 = arith.constant 200 : i32
      %398 = arith.addi %95, %c200_i32_81 : i32
      %c3_i32_82 = arith.constant 3 : i32
      %399 = arith.addi %398, %c3_i32_82 : i32
      %400 = arith.index_cast %399 : i32 to index
      %c0_83 = arith.constant 0 : index
      %401 = vector.load %arg3[%400, %c0_83] : memref<2512x128xf32, #tpu.memory_space<vmem>>, vector<64x128xf32>
      %402 = vector.broadcast %23 : f32 to vector<64x128xf32>
      %403 = arith.mulf %401, %402 : vector<64x128xf32>
      %404 = arith.addf %391, %403 : vector<64x128xf32>
      %405 = vector.broadcast %48 : f32 to vector<64x128xf32>
      %406 = arith.mulf %401, %405 : vector<64x128xf32>
      %407 = arith.addf %394, %406 : vector<64x128xf32>
      %408 = vector.broadcast %73 : f32 to vector<64x128xf32>
      %409 = arith.mulf %401, %408 : vector<64x128xf32>
      %410 = arith.addf %397, %409 : vector<64x128xf32>
      %c200_i32_84 = arith.constant 200 : i32
      %411 = arith.addi %95, %c200_i32_84 : i32
      %c4_i32_85 = arith.constant 4 : i32
      %412 = arith.addi %411, %c4_i32_85 : i32
      %413 = arith.index_cast %412 : i32 to index
      %c0_86 = arith.constant 0 : index
      %414 = vector.load %arg3[%413, %c0_86] : memref<2512x128xf32, #tpu.memory_space<vmem>>, vector<64x128xf32>
      %415 = vector.broadcast %24 : f32 to vector<64x128xf32>
      %416 = arith.mulf %414, %415 : vector<64x128xf32>
      %417 = arith.addf %404, %416 : vector<64x128xf32>
      %418 = vector.broadcast %49 : f32 to vector<64x128xf32>
      %419 = arith.mulf %414, %418 : vector<64x128xf32>
      %420 = arith.addf %407, %419 : vector<64x128xf32>
      %421 = vector.broadcast %74 : f32 to vector<64x128xf32>
      %422 = arith.mulf %414, %421 : vector<64x128xf32>
      %423 = arith.addf %410, %422 : vector<64x128xf32>
      %cst_87 = arith.constant 0.000000e+00 : f32
      %424 = vector.broadcast %cst_87 : f32 to vector<64x128xf32>
      %425 = arith.maximumf %417, %424 : vector<64x128xf32>
      %426 = arith.truncf %425 : vector<64x128xf32> to vector<64x128xbf16>
      %cst_88 = arith.constant 0.000000e+00 : f32
      %427 = vector.broadcast %cst_88 : f32 to vector<64x128xf32>
      %428 = arith.maximumf %420, %427 : vector<64x128xf32>
      %429 = arith.truncf %428 : vector<64x128xf32> to vector<64x128xbf16>
      %cst_89 = arith.constant 0.000000e+00 : f32
      %430 = vector.broadcast %cst_89 : f32 to vector<64x128xf32>
      %431 = arith.maximumf %423, %430 : vector<64x128xf32>
      %432 = arith.truncf %431 : vector<64x128xf32> to vector<64x128xbf16>
      %c0_i32_90 = arith.constant 0 : i32
      %433 = arith.addi %c0_i32_90, %93 : i32
      %434 = arith.index_cast %433 : i32 to index
      %c0_91 = arith.constant 0 : index
      %c0_92 = arith.constant 0 : index
      %435 = vector.load %arg4[%434, %c0_91, %c0_92] : memref<108x128x64xbf16, #tpu.memory_space<vmem>>, vector<1x128x64xbf16>
      %436 = vector.shape_cast %435 : vector<1x128x64xbf16> to vector<128x64xbf16>
      %cst_93 = arith.constant dense<0.000000e+00> : vector<128x128xf32>
      %437 = tpu.matmul %436, %426, %cst_93 {dimension_numbers = #tpu.dot_dimension_numbers<[1], [0], [0], [1], [0, 0, 1, 1], [], []>} : vector<128x64xbf16>, vector<64x128xbf16>, vector<128x128xf32> -> vector<128x128xf32>
      %c36_i32_94 = arith.constant 36 : i32
      %438 = arith.addi %c36_i32_94, %93 : i32
      %439 = arith.index_cast %438 : i32 to index
      %c0_95 = arith.constant 0 : index
      %c0_96 = arith.constant 0 : index
      %440 = vector.load %arg4[%439, %c0_95, %c0_96] : memref<108x128x64xbf16, #tpu.memory_space<vmem>>, vector<1x128x64xbf16>
      %441 = vector.shape_cast %440 : vector<1x128x64xbf16> to vector<128x64xbf16>
      %cst_97 = arith.constant dense<0.000000e+00> : vector<128x128xf32>
      %442 = tpu.matmul %441, %429, %cst_97 {dimension_numbers = #tpu.dot_dimension_numbers<[1], [0], [0], [1], [0, 0, 1, 1], [], []>} : vector<128x64xbf16>, vector<64x128xbf16>, vector<128x128xf32> -> vector<128x128xf32>
      %443 = arith.addf %437, %442 : vector<128x128xf32>
      %c72_i32 = arith.constant 72 : i32
      %444 = arith.addi %c72_i32, %93 : i32
      %445 = arith.index_cast %444 : i32 to index
      %c0_98 = arith.constant 0 : index
      %c0_99 = arith.constant 0 : index
      %446 = vector.load %arg4[%445, %c0_98, %c0_99] : memref<108x128x64xbf16, #tpu.memory_space<vmem>>, vector<1x128x64xbf16>
      %447 = vector.shape_cast %446 : vector<1x128x64xbf16> to vector<128x64xbf16>
      %cst_100 = arith.constant dense<0.000000e+00> : vector<128x128xf32>
      %448 = tpu.matmul %447, %432, %cst_100 {dimension_numbers = #tpu.dot_dimension_numbers<[1], [0], [0], [1], [0, 0, 1, 1], [], []>} : vector<128x64xbf16>, vector<64x128xbf16>, vector<128x128xf32> -> vector<128x128xf32>
      %449 = arith.addf %443, %448 : vector<128x128xf32>
      %c0_101 = arith.constant 0 : index
      %c0_102 = arith.constant 0 : index
      %450 = vector.load %arg9[%c0_101, %c0_102] : memref<128x128xf32, #tpu.memory_space<vmem>>, vector<128x128xf32>
      %451 = arith.addf %450, %449 : vector<128x128xf32>
      %c0_103 = arith.constant 0 : index
      %c0_104 = arith.constant 0 : index
      %452 = vector.load %arg9[%c0_103, %c0_104] : memref<128x128xf32, #tpu.memory_space<vmem>>, vector<128x128xf32>
      tpu.vector_store %arg9[%c0_103, %c0_104], %451 {strides = array<i32>} : memref<128x128xf32, #tpu.memory_space<vmem>>, vector<128x128xf32>,
    }
    %c36_i32_7 = arith.constant 36 : i32
    %c0_8 = arith.constant 0 : index
    %c0_9 = arith.constant 0 : index
    %83 = vector.load %arg9[%c0_8, %c0_9] : memref<128x128xf32, #tpu.memory_space<vmem>>, vector<128x128xf32>
    %cst = arith.constant 0.000000e+00 : f32
    %84 = vector.broadcast %cst : f32 to vector<128x128xf32>
    %85 = arith.maximumf %83, %84 : vector<128x128xf32>
    %c0_10 = arith.constant 0 : index
    %c0_11 = arith.constant 0 : index
    %86 = vector.load %arg6[%c0_10, %c0_11] : memref<3x128xf32, #tpu.memory_space<vmem>>, vector<3x128xf32>
    %cst_12 = arith.constant dense<0.000000e+00> : vector<3x128xf32>
    %87 = tpu.matmul %86, %85, %cst_12 {dimension_numbers = #tpu.dot_dimension_numbers<[1], [0], [0], [1], [0, 0, 1, 1], [], []>} : vector<3x128xf32>, vector<128x128xf32>, vector<3x128xf32> -> vector<3x128xf32>
    %c0_13 = arith.constant 0 : index
    %c0_14 = arith.constant 0 : index
    %88 = vector.load %arg7[%c0_13, %c0_14] : memref<3x1xf32, #tpu.memory_space<vmem>>, vector<3x1xf32>
    %89 = vector.broadcast %88 : vector<3x1xf32> to vector<3x128xf32>
    %90 = arith.addf %87, %89 : vector<3x128xf32>
    %c0_15 = arith.constant 0 : index
    %c0_16 = arith.constant 0 : index
    %91 = vector.load %arg8[%c0_15, %c0_16] : memref<3x128xf32, #tpu.memory_space<vmem>>, vector<3x128xf32>
    tpu.vector_store %arg8[%c0_15, %c0_16], %90 {strides = array<i32>} : memref<3x128xf32, #tpu.memory_space<vmem>>, vector<3x128xf32>,
    return
  }
  func.func @transform_0(%arg0: i32) -> i32 {
    %c0_i32 = arith.constant 0 : i32
    %c0_i32_0 = arith.constant 0 : i32
    return %c0_i32 : i32
  }
  func.func @transform_1(%arg0: i32) -> i32 {
    %c0_i32 = arith.constant 0 : i32
    %c0_i32_0 = arith.constant 0 : i32
    return %c0_i32 : i32
  }
  func.func @transform_2(%arg0: i32) -> (i32, i32) {
    %c0_i32 = arith.constant 0 : i32
    %c0_i32_0 = arith.constant 0 : i32
    return %c0_i32, %arg0 : i32, i32
  }
  func.func @transform_3(%arg0: i32) -> (i32, i32, i32) {
    %c0_i32 = arith.constant 0 : i32
    %c0_i32_0 = arith.constant 0 : i32
    %c0_i32_1 = arith.constant 0 : i32
    %c0_i32_2 = arith.constant 0 : i32
    return %c0_i32, %c0_i32_0, %c0_i32_1 : i32, i32, i32
  }
  func.func @transform_4(%arg0: i32) -> (i32, i32) {
    %c0_i32 = arith.constant 0 : i32
    %c0_i32_0 = arith.constant 0 : i32
    %c0_i32_1 = arith.constant 0 : i32
    return %c0_i32, %c0_i32_0 : i32, i32
  }
  func.func @transform_5(%arg0: i32) -> (i32, i32) {
    %c0_i32 = arith.constant 0 : i32
    %c0_i32_0 = arith.constant 0 : i32
    %c0_i32_1 = arith.constant 0 : i32
    return %c0_i32, %c0_i32_0 : i32, i32
  }
  func.func @transform_6(%arg0: i32) -> (i32, i32) {
    %c0_i32 = arith.constant 0 : i32
    %c0_i32_0 = arith.constant 0 : i32
    %c0_i32_1 = arith.constant 0 : i32
    return %c0_i32, %c0_i32_0 : i32, i32
  }
  func.func @transform_7(%arg0: i32) -> (i32, i32) {
    %c0_i32 = arith.constant 0 : i32
    %c0_i32_0 = arith.constant 0 : i32
    return %c0_i32, %arg0 : i32, i32
  }
}

</mosaic_0001>

<llo_original>
// kernel: calvis1cnn_forward.1
$region0: #{calvis1cnn_forward.1}
  #allocation0 [shape = 'u32[]', space=smem, size = 0x4, offset = 0x4, fixed_abs, tag = 'smem constant byte address 0x4 - core index']
  #allocation1 [shape = 'u32[72,128]{1,0:T(1,128)}', space=vmem, size = 0x9000, scoped, tag = 'internal scratch']
  #allocation2 [shape = 'f32[128,128]{1,0:T(8,128)}', space=vmem, size = 0x10000, scoped, tag = 'scratch operand']
  %s0 = inlined_call_operand.vmem [shape: f32[75], index: 0, kind: input, shape index: {}]
  %s1 = inlined_call_operand.vmem [shape: f32[3], index: 1, kind: input, shape index: {}]
  %s2 = inlined_call_operand.vmem [shape: f32[2512,128], index: 2, kind: input, shape index: {}]
  %s3 = inlined_call_operand.vmem [shape: bf16[108,128,64], index: 3, kind: input, shape index: {}]
  %s4 = inlined_call_operand.vmem [shape: f32[128,1], index: 4, kind: input, shape index: {}]
  %s5 = inlined_call_operand.vmem [shape: f32[3,128], index: 5, kind: input, shape index: {}]
  %s6 = inlined_call_operand.vmem [shape: f32[3,1], index: 6, kind: input, shape index: {}]
  %s7 = inlined_call_operand.vmem [shape: f32[3,128], index: 7, kind: output, shape index: {}]
  %s8 = sld [smem:[#allocation0]]
  $region53: #{calvis1cnn_forward.1} parent=0
    _
  %s10 = ssub.s32 1, %s8
  %s11 = scalar_select 0, %s10, %s8
  $region1: #{calvis1cnn_forward.1} parent=0
    #allocation3 [shape = 'u8[512]{0}', space=smem, size = 0x200, scoped, tag = 'input window, operand 0, single buffered']
    #allocation4 [shape = 's32[1]{0}', space=sflag, size = 0x4, scoped, tag = 'scoped memory for calvis1cnn_forward.1']
    #allocation5 [shape = 'u8[512]{0}', space=smem, size = 0x200, scoped, tag = 'input window, operand 1, single buffered']
    #allocation6 [shape = 's32[1]{0}', space=sflag, size = 0x4, scoped, tag = 'scoped memory for calvis1cnn_forward.1']
    %12 = vsyncpa [#allocation4], 0
    %13 = vsyncpa [#allocation6], 0
    // Predicated region
    $region2: #{calvis1cnn_forward.1} parent=1 // pred_check
      _
    $region3: #{calvis1cnn_forward.1} parent=1 // pred_check_branch
      %15 = sbr.rel (0) target = $region5
    $region4: #{calvis1cnn_forward.1} parent=1 // pred_region
      %17 = vsyncadd [#allocation4], 0
      %s19 = sshll.u32 %s0, 4
      %s20 = int_to_ptr.vmem [resolvable:$true] %s19
      %22 = dma.vmem_to_smem %s20, 16, [#allocation3], [#allocation4]
    $region5: #{calvis1cnn_forward.1} parent=1 // pred_fallthru
      _
    // Predicated region
    $region6: #{calvis1cnn_forward.1} parent=1 // pred_check
      _
    $region7: #{calvis1cnn_forward.1} parent=1 // pred_check_branch
      %24 = sbr.rel (0) target = $region9
    $region8: #{calvis1cnn_forward.1} parent=1 // pred_region
      %26 = vsyncadd [#allocation6], 0
      %s28 = sshll.u32 %s1, 4
      %s29 = int_to_ptr.vmem [resolvable:$true] %s28
      %31 = dma.vmem_to_smem %s29, 16, [#allocation5], [#allocation6]
    $region9: #{calvis1cnn_forward.1} parent=1 // pred_fallthru
      _
    // Predicated region
    $region10: #{calvis1cnn_forward.1} parent=1 // pred_check
      _
    $region11: #{calvis1cnn_forward.1} parent=1 // pred_check_branch
      %33 = sbr.rel (0) target = $region13
    $region12: #{calvis1cnn_forward.1} parent=1 // pred_region
      _
    $region13: #{calvis1cnn_forward.1} parent=1 // pred_fallthru
      _
    // Predicated region
    $region14: #{calvis1cnn_forward.1} parent=1 // pred_check
      _
    $region15: #{calvis1cnn_forward.1} parent=1 // pred_check_branch
      %35 = sbr.rel (0) target = $region17
    $region16: #{calvis1cnn_forward.1} parent=1 // pred_region
      _
    $region17: #{calvis1cnn_forward.1} parent=1 // pred_fallthru
      _
    // Predicated region
    $region18: #{calvis1cnn_forward.1} parent=1 // pred_check
      _
    $region19: #{calvis1cnn_forward.1} parent=1 // pred_check_branch
      %37 = sbr.rel (0) target = $region21
    $region20: #{calvis1cnn_forward.1} parent=1 // pred_region
      _
    $region21: #{calvis1cnn_forward.1} parent=1 // pred_fallthru
      _
    // Predicated region
    $region22: #{calvis1cnn_forward.1} parent=1 // pred_check
      _
    $region23: #{calvis1cnn_forward.1} parent=1 // pred_check_branch
      %39 = sbr.rel (0) target = $region25
    $region24: #{calvis1cnn_forward.1} parent=1 // pred_region
      _
    $region25: #{calvis1cnn_forward.1} parent=1 // pred_fallthru
      _
    // Predicated region
    $region26: #{calvis1cnn_forward.1} parent=1 // pred_check
      _
    $region27: #{calvis1cnn_forward.1} parent=1 // pred_check_branch
      %41 = sbr.rel (0) target = $region29
    $region28: #{calvis1cnn_forward.1} parent=1 // pred_region
      _
    $region29: #{calvis1cnn_forward.1} parent=1 // pred_fallthru
      _
    // Predicated region
    $region30: #{calvis1cnn_forward.1} parent=1 // pred_check
      _
    $region31: #{calvis1cnn_forward.1} parent=1 // pred_check_branch
      %43 = sbr.rel (0) target = $region33
    $region32: #{calvis1cnn_forward.1} parent=1 // pred_region
      %45 = dma.done [#allocation4], 16
    $region33: #{calvis1cnn_forward.1} parent=1 // pred_fallthru
      _
    // Predicated region
    $region34: #{calvis1cnn_forward.1} parent=1 // pred_check
      _
    $region35: #{calvis1cnn_forward.1} parent=1 // pred_check_branch
      %47 = sbr.rel (0) target = $region37
    $region36: #{calvis1cnn_forward.1} parent=1 // pred_region
      %49 = dma.done [#allocation6], 16
    $region37: #{calvis1cnn_forward.1} parent=1 // pred_fallthru
      _
    %50 = sfence
    %s52 = sld [smem:[#allocation3]]
    %s53 = sld [smem:[#allocation3 + $0x1]]
    %s54 = sld [smem:[#allocation3 + $0x2]]
    %s55 = sld [smem:[#allocation3 + $0x3]]
    %s56 = sld [smem:[#allocation3 + $0x4]]
    %s57 = sld [smem:[#allocation3 + $0x5]]
    %s58 = sld [smem:[#allocation3 + $0x6]]
    %s59 = sld [smem:[#allocation3 + $0x7]]
    %s60 = sld [smem:[#allocation3 + $0x8]]
    %s61 = sld [smem:[#allocation3 + $0x9]]
    %s62 = sld [smem:[#allocation3 + $0xa]]
    %s63 = sld [smem:[#allocation3 + $0xb]]
    %s64 = sld [smem:[#allocation3 + $0xc]]
    %s65 = sld [smem:[#allocation3 + $0xd]]
    %s66 = sld [smem:[#allocation3 + $0xe]]
    %s67 = sld [smem:[#allocation3 + $0xf]]
    %s68 = sld [smem:[#allocation3 + $0x10]]
    %s69 = sld [smem:[#allocation3 + $0x11]]
    %s70 = sld [smem:[#allocation3 + $0x12]]
    %s71 = sld [smem:[#allocation3 + $0x13]]
    %s72 = sld [smem:[#allocation3 + $0x14]]
    %s73 = sld [smem:[#allocation3 + $0x15]]
    %s74 = sld [smem:[#allocation3 + $0x16]]
    %s75 = sld [smem:[#allocation3 + $0x17]]
    %s76 = sld [smem:[#allocation3 + $0x18]]
    %s77 = sld [smem:[#allocation3 + $0x19]]
    %s78 = sld [smem:[#allocation3 + $0x1a]]
    %s79 = sld [smem:[#allocation3 + $0x1b]]
    %s80 = sld [smem:[#allocation3 + $0x1c]]
    %s81 = sld [smem:[#allocation3 + $0x1d]]
    %s82 = sld [smem:[#allocation3 + $0x1e]]
    %s83 = sld [smem:[#allocation3 + $0x1f]]
    %s84 = sld [smem:[#allocation3 + $0x20]]
    %s85 = sld [smem:[#allocation3 + $0x21]]
    %s86 = sld [smem:[#allocation3 + $0x22]]
    %s87 = sld [smem:[#allocation3 + $0x23]]
    %s88 = sld [smem:[#allocation3 + $0x24]]
    %s89 = sld [smem:[#allocation3 + $0x25]]
    %s90 = sld [smem:[#allocation3 + $0x26]]
    %s91 = sld [smem:[#allocation3 + $0x27]]
    %s92 = sld [smem:[#allocation3 + $0x28]]
    %s93 = sld [smem:[#allocation3 + $0x29]]
    %s94 = sld [smem:[#allocation3 + $0x2a]]
    %s95 = sld [smem:[#allocation3 + $0x2b]]
    %s96 = sld [smem:[#allocation3 + $0x2c]]
    %s97 = sld [smem:[#allocation3 + $0x2d]]
    %s98 = sld [smem:[#allocation3 + $0x2e]]
    %s99 = sld [smem:[#allocation3 + $0x2f]]
    %s100 = sld [smem:[#allocation3 + $0x30]]
    %s101 = sld [smem:[#allocation3 + $0x31]]
    %s102 = sld [smem:[#allocation3 + $0x32]]
    %s103 = sld [smem:[#allocation3 + $0x33]]
    %s104 = sld [smem:[#allocation3 + $0x34]]
    %s105 = sld [smem:[#allocation3 + $0x35]]
    %s106 = sld [smem:[#allocation3 + $0x36]]
    %s107 = sld [smem:[#allocation3 + $0x37]]
    %s108 = sld [smem:[#allocation3 + $0x38]]
    %s109 = sld [smem:[#allocation3 + $0x39]]
    %s110 = sld [smem:[#allocation3 + $0x3a]]
    %s111 = sld [smem:[#allocation3 + $0x3b]]
    %s112 = sld [smem:[#allocation3 + $0x3c]]
    %s113 = sld [smem:[#allocation3 + $0x3d]]
    %s114 = sld [smem:[#allocation3 + $0x3e]]
    %s115 = sld [smem:[#allocation3 + $0x3f]]
    %s116 = sld [smem:[#allocation3 + $0x40]]
    %s117 = sld [smem:[#allocation3 + $0x41]]
    %s118 = sld [smem:[#allocation3 + $0x42]]
    %s119 = sld [smem:[#allocation3 + $0x43]]
    %s120 = sld [smem:[#allocation3 + $0x44]]
    %s121 = sld [smem:[#allocation3 + $0x45]]
    %s122 = sld [smem:[#allocation3 + $0x46]]
    %s123 = sld [smem:[#allocation3 + $0x47]]
    %s124 = sld [smem:[#allocation3 + $0x48]]
    %s125 = sld [smem:[#allocation3 + $0x49]]
    %s126 = sld [smem:[#allocation3 + $0x4a]]
    %s127 = sld [smem:[#allocation5]]
    %s128 = sld [smem:[#allocation5 + $0x1]]
    %s129 = sld [smem:[#allocation5 + $0x2]]
    %v130 = vld [vmem:[%s4] sm:$0xff]
    %v131 = vld [vmem:[%s4 + $0x8] sm:$0xff]
    %v132 = vld [vmem:[%s4 + $0x10] sm:$0xff]
    %v133 = vld [vmem:[%s4 + $0x18] sm:$0xff]
    %v134 = vld [vmem:[%s4 + $0x20] sm:$0xff]
    %v135 = vld [vmem:[%s4 + $0x28] sm:$0xff]
    %v136 = vld [vmem:[%s4 + $0x30] sm:$0xff]
    %v137 = vld [vmem:[%s4 + $0x38] sm:$0xff]
    %v138 = vld [vmem:[%s4 + $0x40] sm:$0xff]
    %v139 = vld [vmem:[%s4 + $0x48] sm:$0xff]
    %v140 = vld [vmem:[%s4 + $0x50] sm:$0xff]
    %v141 = vld [vmem:[%s4 + $0x58] sm:$0xff]
    %v142 = vld [vmem:[%s4 + $0x60] sm:$0xff]
    %v143 = vld [vmem:[%s4 + $0x68] sm:$0xff]
    %v144 = vld [vmem:[%s4 + $0x70] sm:$0xff]
    %v145 = vld [vmem:[%s4 + $0x78] sm:$0xff]
    %147 = vset.pattern.permute.xlu0 0
    %148 = vperm.xlu0 %147, %v130
    %v149 = vpop.permute.xlu0 %148
    %152 = vset.pattern.permute.xlu0 0
    %153 = vperm.xlu0 %152, %v131
    %v154 = vpop.permute.xlu0 %153
    %157 = vset.pattern.permute.xlu0 0
    %158 = vperm.xlu0 %157, %v132
    %v159 = vpop.permute.xlu0 %158
    %162 = vset.pattern.permute.xlu0 0
    %163 = vperm.xlu0 %162, %v133
    %v164 = vpop.permute.xlu0 %163
    %167 = vset.pattern.permute.xlu0 0
    %168 = vperm.xlu0 %167, %v134
    %v169 = vpop.permute.xlu0 %168
    %172 = vset.pattern.permute.xlu0 0
    %173 = vperm.xlu0 %172, %v135
    %v174 = vpop.permute.xlu0 %173
    %177 = vset.pattern.permute.xlu0 0
    %178 = vperm.xlu0 %177, %v136
    %v179 = vpop.permute.xlu0 %178
    %182 = vset.pattern.permute.xlu0 0
    %183 = vperm.xlu0 %182, %v137
    %v184 = vpop.permute.xlu0 %183
    %187 = vset.pattern.permute.xlu0 0
    %188 = vperm.xlu0 %187, %v138
    %v189 = vpop.permute.xlu0 %188
    %192 = vset.pattern.permute.xlu0 0
    %193 = vperm.xlu0 %192, %v139
    %v194 = vpop.permute.xlu0 %193
    %197 = vset.pattern.permute.xlu0 0
    %198 = vperm.xlu0 %197, %v140
    %v199 = vpop.permute.xlu0 %198
    %202 = vset.pattern.permute.xlu0 0
    %203 = vperm.xlu0 %202, %v141
    %v204 = vpop.permute.xlu0 %203
    %207 = vset.pattern.permute.xlu0 0
    %208 = vperm.xlu0 %207, %v142
    %v209 = vpop.permute.xlu0 %208
    %212 = vset.pattern.permute.xlu0 0
    %213 = vperm.xlu0 %212, %v143
    %v214 = vpop.permute.xlu0 %213
    %217 = vset.pattern.permute.xlu0 0
    %218 = vperm.xlu0 %217, %v144
    %v219 = vpop.permute.xlu0 %218
    %222 = vset.pattern.permute.xlu0 0
    %223 = vperm.xlu0 %222, %v145
    %v224 = vpop.permute.xlu0 %223
    %226 = vst [vmem:[#allocation2] sm:$0xff] %v149
    %227 = vst [vmem:[#allocation2 + $0x8] sm:$0xff] %v154
    %228 = vst [vmem:[#allocation2 + $0x10] sm:$0xff] %v159
    %229 = vst [vmem:[#allocation2 + $0x18] sm:$0xff] %v164
    %230 = vst [vmem:[#allocation2 + $0x20] sm:$0xff] %v169
    %231 = vst [vmem:[#allocation2 + $0x28] sm:$0xff] %v174
    %232 = vst [vmem:[#allocation2 + $0x30] sm:$0xff] %v179
    %233 = vst [vmem:[#allocation2 + $0x38] sm:$0xff] %v184
    %234 = vst [vmem:[#allocation2 + $0x40] sm:$0xff] %v189
    %235 = vst [vmem:[#allocation2 + $0x48] sm:$0xff] %v194
    %236 = vst [vmem:[#allocation2 + $0x50] sm:$0xff] %v199
    %237 = vst [vmem:[#allocation2 + $0x58] sm:$0xff] %v204
    %238 = vst [vmem:[#allocation2 + $0x60] sm:$0xff] %v209
    %239 = vst [vmem:[#allocation2 + $0x68] sm:$0xff] %v214
    %240 = vst [vmem:[#allocation2 + $0x70] sm:$0xff] %v219
    %241 = vst [vmem:[#allocation2 + $0x78] sm:$0xff] %v224
    loop: start=0, step=1, limit=36
    $region38: #{calvis1cnn_forward.1} parent=1 // loop_pre_header
      _
    $region39: #{calvis1cnn_forward.1} parent=1 // loop_header
      %s243 = sphi 0, %s247
      %p244 = scmp.ge.s32.totalorder %s243, 36
    $region40: #{calvis1cnn_forward.1} parent=1 // loop_header_branch
      %246 = sbr.rel (%p244) target = $region44
    $region41: #{calvis1cnn_forward.1} parent=1 // loop_body
      %s248 = smul.u32 %s243, 64
      %s249 = scalar_lea.vmem %s2, %s248
      %v250 = vld [vmem:[%s249] sm:$0xff]
      %v251 = vld [vmem:[%s249 + $0x8] sm:$0xff]
      %v252 = vld [vmem:[%s249 + $0x10] sm:$0xff]
      %v253 = vld [vmem:[%s249 + $0x18] sm:$0xff]
      %v254 = vld [vmem:[%s249 + $0x20] sm:$0xff]
      %v255 = vld [vmem:[%s249 + $0x28] sm:$0xff]
      %v256 = vld [vmem:[%s249 + $0x30] sm:$0xff]
      %v257 = vld [vmem:[%s249 + $0x38] sm:$0xff]
      %v258 = vstv %s52
      %v259 = vmul.f32 %v250, %v258
      %v260 = vmul.f32 %v251, %v258
      %v261 = vmul.f32 %v252, %v258
      %v262 = vmul.f32 %v253, %v258
      %v263 = vmul.f32 %v254, %v258
      %v264 = vmul.f32 %v255, %v258
      %v265 = vmul.f32 %v256, %v258
      %v266 = vmul.f32 %v257, %v258
      %v267 = vstv %s127
      %v268 = vadd.f32 %v259, %v267
      %v269 = vadd.f32 %v260, %v267
      %v270 = vadd.f32 %v261, %v267
      %v271 = vadd.f32 %v262, %v267
      %v272 = vadd.f32 %v263, %v267
      %v273 = vadd.f32 %v264, %v267
      %v274 = vadd.f32 %v265, %v267
      %v275 = vadd.f32 %v266, %v267
      %v276 = vstv %s77
      %v277 = vmul.f32 %v250, %v276
      %v278 = vmul.f32 %v251, %v276
      %v279 = vmul.f32 %v252, %v276
      %v280 = vmul.f32 %v253, %v276
      %v281 = vmul.f32 %v254, %v276
      %v282 = vmul.f32 %v255, %v276
      %v283 = vmul.f32 %v256, %v276
      %v284 = vmul.f32 %v257, %v276
      %v285 = vstv %s128
      %v286 = vadd.f32 %v277, %v285
      %v287 = vadd.f32 %v278, %v285
      %v288 = vadd.f32 %v279, %v285
      %v289 = vadd.f32 %v280, %v285
      %v290 = vadd.f32 %v281, %v285
      %v291 = vadd.f32 %v282, %v285
      %v292 = vadd.f32 %v283, %v285
      %v293 = vadd.f32 %v284, %v285
      %v294 = vstv %s102
      %v295 = vmul.f32 %v250, %v294
      %v296 = vmul.f32 %v251, %v294
      %v297 = vmul.f32 %v252, %v294
      %v298 = vmul.f32 %v253, %v294
      %v299 = vmul.f32 %v254, %v294
      %v300 = vmul.f32 %v255, %v294
      %v301 = vmul.f32 %v256, %v294
      %v302 = vmul.f32 %v257, %v294
      %v303 = vstv %s129
      %v304 = vadd.f32 %v295, %v303
      %v305 = vadd.f32 %v296, %v303
      %v306 = vadd.f32 %v297, %v303
      %v307 = vadd.f32 %v298, %v303
      %v308 = vadd.f32 %v299, %v303
      %v309 = vadd.f32 %v300, %v303
      %v310 = vadd.f32 %v301, %v303
      %v311 = vadd.f32 %v302, %v303
      %s312 = sadd.s32 %s248, 1
      %s313 = scalar_lea.vmem %s2, %s312
      %v314 = vld [vmem:[%s313] sm:$0xff]
      %v315 = vld [vmem:[%s313 + $0x8] sm:$0xff]
      %v316 = vld [vmem:[%s313 + $0x10] sm:$0xff]
      %v317 = vld [vmem:[%s313 + $0x18] sm:$0xff]
      %v318 = vld [vmem:[%s313 + $0x20] sm:$0xff]
      %v319 = vld [vmem:[%s313 + $0x28] sm:$0xff]
      %v320 = vld [vmem:[%s313 + $0x30] sm:$0xff]
      %v321 = vld [vmem:[%s313 + $0x38] sm:$0xff]
      %v322 = vstv %s53
      %v323 = vmul.f32 %v314, %v322
      %v324 = vmul.f32 %v315, %v322
      %v325 = vmul.f32 %v316, %v322
      %v326 = vmul.f32 %v317, %v322
      %v327 = vmul.f32 %v318, %v322
      %v328 = vmul.f32 %v319, %v322
      %v329 = vmul.f32 %v320, %v322
      %v330 = vmul.f32 %v321, %v322
      %v331 = vadd.f32 %v268, %v323
      %v332 = vadd.f32 %v269, %v324
      %v333 = vadd.f32 %v270, %v325
      %v334 = vadd.f32 %v271, %v326
      %v335 = vadd.f32 %v272, %v327
      %v336 = vadd.f32 %v273, %v328
      %v337 = vadd.f32 %v274, %v329
      %v338 = vadd.f32 %v275, %v330
      %v339 = vstv %s78
      %v340 = vmul.f32 %v314, %v339
      %v341 = vmul.f32 %v315, %v339
      %v342 = vmul.f32 %v316, %v339
      %v343 = vmul.f32 %v317, %v339
      %v344 = vmul.f32 %v318, %v339
      %v345 = vmul.f32 %v319, %v339
      %v346 = vmul.f32 %v320, %v339
      %v347 = vmul.f32 %v321, %v339
      %v348 = vadd.f32 %v286, %v340
      %v349 = vadd.f32 %v287, %v341
      %v350 = vadd.f32 %v288, %v342
      %v351 = vadd.f32 %v289, %v343
      %v352 = vadd.f32 %v290, %v344
      %v353 = vadd.f32 %v291, %v345
      %v354 = vadd.f32 %v292, %v346
      %v355 = vadd.f32 %v293, %v347
      %v356 = vstv %s103
      %v357 = vmul.f32 %v314, %v356
      %v358 = vmul.f32 %v315, %v356
      %v359 = vmul.f32 %v316, %v356
      %v360 = vmul.f32 %v317, %v356
      %v361 = vmul.f32 %v318, %v356
      %v362 = vmul.f32 %v319, %v356
      %v363 = vmul.f32 %v320, %v356
      %v364 = vmul.f32 %v321, %v356
      %v365 = vadd.f32 %v304, %v357
      %v366 = vadd.f32 %v305, %v358
      %v367 = vadd.f32 %v306, %v359
      %v368 = vadd.f32 %v307, %v360
      %v369 = vadd.f32 %v308, %v361
      %v370 = vadd.f32 %v309, %v362
      %v371 = vadd.f32 %v310, %v363
      %v372 = vadd.f32 %v311, %v364
      %s373 = sadd.s32 %s248, 2
      %s374 = scalar_lea.vmem %s2, %s373
      %v375 = vld [vmem:[%s374] sm:$0xff]
      %v376 = vld [vmem:[%s374 + $0x8] sm:$0xff]
      %v377 = vld [vmem:[%s374 + $0x10] sm:$0xff]
      %v378 = vld [vmem:[%s374 + $0x18] sm:$0xff]
      %v379 = vld [vmem:[%s374 + $0x20] sm:$0xff]
      %v380 = vld [vmem:[%s374 + $0x28] sm:$0xff]
      %v381 = vld [vmem:[%s374 + $0x30] sm:$0xff]
      %v382 = vld [vmem:[%s374 + $0x38] sm:$0xff]
      %v383 = vstv %s54
      %v384 = vmul.f32 %v375, %v383
      %v385 = vmul.f32 %v376, %v383
      %v386 = vmul.f32 %v377, %v383
      %v387 = vmul.f32 %v378, %v383
      %v388 = vmul.f32 %v379, %v383
      %v389 = vmul.f32 %v380, %v383
      %v390 = vmul.f32 %v381, %v383
      %v391 = vmul.f32 %v382, %v383
      %v392 = vadd.f32 %v331, %v384
      %v393 = vadd.f32 %v332, %v385
      %v394 = vadd.f32 %v333, %v386
      %v395 = vadd.f32 %v334, %v387
      %v396 = vadd.f32 %v335, %v388
      %v397 = vadd.f32 %v336, %v389
      %v398 = vadd.f32 %v337, %v390
      %v399 = vadd.f32 %v338, %v391
      %v400 = vstv %s79
      %v401 = vmul.f32 %v375, %v400
      %v402 = vmul.f32 %v376, %v400
      %v403 = vmul.f32 %v377, %v400
      %v404 = vmul.f32 %v378, %v400
      %v405 = vmul.f32 %v379, %v400
      %v406 = vmul.f32 %v380, %v400
      %v407 = vmul.f32 %v381, %v400
      %v408 = vmul.f32 %v382, %v400
      %v409 = vadd.f32 %v348, %v401
      %v410 = vadd.f32 %v349, %v402
      %v411 = vadd.f32 %v350, %v403
      %v412 = vadd.f32 %v351, %v404
      %v413 = vadd.f32 %v352, %v405
      %v414 = vadd.f32 %v353, %v406
      %v415 = vadd.f32 %v354, %v407
      %v416 = vadd.f32 %v355, %v408
      %v417 = vstv %s104
      %v418 = vmul.f32 %v375, %v417
      %v419 = vmul.f32 %v376, %v417
      %v420 = vmul.f32 %v377, %v417
      %v421 = vmul.f32 %v378, %v417
      %v422 = vmul.f32 %v379, %v417
      %v423 = vmul.f32 %v380, %v417
      %v424 = vmul.f32 %v381, %v417
      %v425 = vmul.f32 %v382, %v417
      %v426 = vadd.f32 %v365, %v418
      %v427 = vadd.f32 %v366, %v419
      %v428 = vadd.f32 %v367, %v420
      %v429 = vadd.f32 %v368, %v421
      %v430 = vadd.f32 %v369, %v422
      %v431 = vadd.f32 %v370, %v423
      %v432 = vadd.f32 %v371, %v424
      %v433 = vadd.f32 %v372, %v425
      %s434 = sadd.s32 %s248, 3
      %s435 = scalar_lea.vmem %s2, %s434
      %v436 = vld [vmem:[%s435] sm:$0xff]
      %v437 = vld [vmem:[%s435 + $0x8] sm:$0xff]
      %v438 = vld [vmem:[%s435 + $0x10] sm:$0xff]
      %v439 = vld [vmem:[%s435 + $0x18] sm:$0xff]
      %v440 = vld [vmem:[%s435 + $0x20] sm:$0xff]
      %v441 = vld [vmem:[%s435 + $0x28] sm:$0xff]
      %v442 = vld [vmem:[%s435 + $0x30] sm:$0xff]
      %v443 = vld [vmem:[%s435 + $0x38] sm:$0xff]
      %v444 = vstv %s55
      %v445 = vmul.f32 %v436, %v444
      %v446 = vmul.f32 %v437, %v444
      %v447 = vmul.f32 %v438, %v444
      %v448 = vmul.f32 %v439, %v444
      %v449 = vmul.f32 %v440, %v444
      %v450 = vmul.f32 %v441, %v444
      %v451 = vmul.f32 %v442, %v444
      %v452 = vmul.f32 %v443, %v444
      %v453 = vadd.f32 %v392, %v445
      %v454 = vadd.f32 %v393, %v446
      %v455 = vadd.f32 %v394, %v447
      %v456 = vadd.f32 %v395, %v448
      %v457 = vadd.f32 %v396, %v449
      %v458 = vadd.f32 %v397, %v450
      %v459 = vadd.f32 %v398, %v451
      %v460 = vadd.f32 %v399, %v452
      %v461 = vstv %s80
      %v462 = vmul.f32 %v436, %v461
      %v463 = vmul.f32 %v437, %v461
      %v464 = vmul.f32 %v438, %v461
      %v465 = vmul.f32 %v439, %v461
      %v466 = vmul.f32 %v440, %v461
      %v467 = vmul.f32 %v441, %v461
      %v468 = vmul.f32 %v442, %v461
      %v469 = vmul.f32 %v443, %v461
      %v470 = vadd.f32 %v409, %v462
      %v471 = vadd.f32 %v410, %v463
      %v472 = vadd.f32 %v411, %v464
      %v473 = vadd.f32 %v412, %v465
      %v474 = vadd.f32 %v413, %v466
      %v475 = vadd.f32 %v414, %v467
      %v476 = vadd.f32 %v415, %v468
      %v477 = vadd.f32 %v416, %v469
      %v478 = vstv %s105
      %v479 = vmul.f32 %v436, %v478
      %v480 = vmul.f32 %v437, %v478
      %v481 = vmul.f32 %v438, %v478
      %v482 = vmul.f32 %v439, %v478
      %v483 = vmul.f32 %v440, %v478
      %v484 = vmul.f32 %v441, %v478
      %v485 = vmul.f32 %v442, %v478
      %v486 = vmul.f32 %v443, %v478
      %v487 = vadd.f32 %v426, %v479
      %v488 = vadd.f32 %v427, %v480
      %v489 = vadd.f32 %v428, %v481
      %v490 = vadd.f32 %v429, %v482
      %v491 = vadd.f32 %v430, %v483
      %v492 = vadd.f32 %v431, %v484
      %v493 = vadd.f32 %v432, %v485
      %v494 = vadd.f32 %v433, %v486
      %s495 = sadd.s32 %s248, 4
      %s496 = scalar_lea.vmem %s2, %s495
      %v497 = vld [vmem:[%s496] sm:$0xff]
      %v498 = vld [vmem:[%s496 + $0x8] sm:$0xff]
      %v499 = vld [vmem:[%s496 + $0x10] sm:$0xff]
      %v500 = vld [vmem:[%s496 + $0x18] sm:$0xff]
      %v501 = vld [vmem:[%s496 + $0x20] sm:$0xff]
      %v502 = vld [vmem:[%s496 + $0x28] sm:$0xff]
      %v503 = vld [vmem:[%s496 + $0x30] sm:$0xff]
      %v504 = vld [vmem:[%s496 + $0x38] sm:$0xff]
      %v505 = vstv %s56
      %v506 = vmul.f32 %v497, %v505
      %v507 = vmul.f32 %v498, %v505
      %v508 = vmul.f32 %v499, %v505
      %v509 = vmul.f32 %v500, %v505
      %v510 = vmul.f32 %v501, %v505
      %v511 = vmul.f32 %v502, %v505
      %v512 = vmul.f32 %v503, %v505
      %v513 = vmul.f32 %v504, %v505
      %v514 = vadd.f32 %v453, %v506
      %v515 = vadd.f32 %v454, %v507
      %v516 = vadd.f32 %v455, %v508
      %v517 = vadd.f32 %v456, %v509
      %v518 = vadd.f32 %v457, %v510
      %v519 = vadd.f32 %v458, %v511
      %v520 = vadd.f32 %v459, %v512
      %v521 = vadd.f32 %v460, %v513
      %v522 = vstv %s81
      %v523 = vmul.f32 %v497, %v522
      %v524 = vmul.f32 %v498, %v522
      %v525 = vmul.f32 %v499, %v522
      %v526 = vmul.f32 %v500, %v522
      %v527 = vmul.f32 %v501, %v522
      %v528 = vmul.f32 %v502, %v522
      %v529 = vmul.f32 %v503, %v522
      %v530 = vmul.f32 %v504, %v522
      %v531 = vadd.f32 %v470, %v523
      %v532 = vadd.f32 %v471, %v524
      %v533 = vadd.f32 %v472, %v525
      %v534 = vadd.f32 %v473, %v526
      %v535 = vadd.f32 %v474, %v527
      %v536 = vadd.f32 %v475, %v528
      %v537 = vadd.f32 %v476, %v529
      %v538 = vadd.f32 %v477, %v530
      %v539 = vstv %s106
      %v540 = vmul.f32 %v497, %v539
      %v541 = vmul.f32 %v498, %v539
      %v542 = vmul.f32 %v499, %v539
      %v543 = vmul.f32 %v500, %v539
      %v544 = vmul.f32 %v501, %v539
      %v545 = vmul.f32 %v502, %v539
      %v546 = vmul.f32 %v503, %v539
      %v547 = vmul.f32 %v504, %v539
      %v548 = vadd.f32 %v487, %v540
      %v549 = vadd.f32 %v488, %v541
      %v550 = vadd.f32 %v489, %v542
      %v551 = vadd.f32 %v490, %v543
      %v552 = vadd.f32 %v491, %v544
      %v553 = vadd.f32 %v492, %v545
      %v554 = vadd.f32 %v493, %v546
      %v555 = vadd.f32 %v494, %v547
      %s556 = sadd.s32 %s248, 50
      %s557 = scalar_lea.vmem %s2, %s556
      %v558 = vld [vmem:[%s557] sm:$0xff]
      %v559 = vld [vmem:[%s557 + $0x8] sm:$0xff]
      %v560 = vld [vmem:[%s557 + $0x10] sm:$0xff]
      %v561 = vld [vmem:[%s557 + $0x18] sm:$0xff]
      %v562 = vld [vmem:[%s557 + $0x20] sm:$0xff]
      %v563 = vld [vmem:[%s557 + $0x28] sm:$0xff]
      %v564 = vld [vmem:[%s557 + $0x30] sm:$0xff]
      %v565 = vld [vmem:[%s557 + $0x38] sm:$0xff]
      %v566 = vstv %s57
      %v567 = vmul.f32 %v558, %v566
      %v568 = vmul.f32 %v559, %v566
      %v569 = vmul.f32 %v560, %v566
      %v570 = vmul.f32 %v561, %v566
      %v571 = vmul.f32 %v562, %v566
      %v572 = vmul.f32 %v563, %v566
      %v573 = vmul.f32 %v564, %v566
      %v574 = vmul.f32 %v565, %v566
      %v575 = vadd.f32 %v514, %v567
      %v576 = vadd.f32 %v515, %v568
      %v577 = vadd.f32 %v516, %v569
      %v578 = vadd.f32 %v517, %v570
      %v579 = vadd.f32 %v518, %v571
      %v580 = vadd.f32 %v519, %v572
      %v581 = vadd.f32 %v520, %v573
      %v582 = vadd.f32 %v521, %v574
      %v583 = vstv %s82
      %v584 = vmul.f32 %v558, %v583
      %v585 = vmul.f32 %v559, %v583
      %v586 = vmul.f32 %v560, %v583
      %v587 = vmul.f32 %v561, %v583
      %v588 = vmul.f32 %v562, %v583
      %v589 = vmul.f32 %v563, %v583
      %v590 = vmul.f32 %v564, %v583
      %v591 = vmul.f32 %v565, %v583
      %v592 = vadd.f32 %v531, %v584
      %v593 = vadd.f32 %v532, %v585
      %v594 = vadd.f32 %v533, %v586
      %v595 = vadd.f32 %v534, %v587
      %v596 = vadd.f32 %v535, %v588
      %v597 = vadd.f32 %v536, %v589
      %v598 = vadd.f32 %v537, %v590
      %v599 = vadd.f32 %v538, %v591
      %v600 = vstv %s107
      %v601 = vmul.f32 %v558, %v600
      %v602 = vmul.f32 %v559, %v600
      %v603 = vmul.f32 %v560, %v600
      %v604 = vmul.f32 %v561, %v600
      %v605 = vmul.f32 %v562, %v600
      %v606 = vmul.f32 %v563, %v600
      %v607 = vmul.f32 %v564, %v600
      %v608 = vmul.f32 %v565, %v600
      %v609 = vadd.f32 %v548, %v601
      %v610 = vadd.f32 %v549, %v602
      %v611 = vadd.f32 %v550, %v603
      %v612 = vadd.f32 %v551, %v604
      %v613 = vadd.f32 %v552, %v605
      %v614 = vadd.f32 %v553, %v606
      %v615 = vadd.f32 %v554, %v607
      %v616 = vadd.f32 %v555, %v608
      %s617 = sadd.s32 %s248, 51
      %s618 = scalar_lea.vmem %s2, %s617
      %v619 = vld [vmem:[%s618] sm:$0xff]
      %v620 = vld [vmem:[%s618 + $0x8] sm:$0xff]
      %v621 = vld [vmem:[%s618 + $0x10] sm:$0xff]
      %v622 = vld [vmem:[%s618 + $0x18] sm:$0xff]
      %v623 = vld [vmem:[%s618 + $0x20] sm:$0xff]
      %v624 = vld [vmem:[%s618 + $0x28] sm:$0xff]
      %v625 = vld [vmem:[%s618 + $0x30] sm:$0xff]
      %v626 = vld [vmem:[%s618 + $0x38] sm:$0xff]
      %v627 = vstv %s58
      %v628 = vmul.f32 %v619, %v627
      %v629 = vmul.f32 %v620, %v627
      %v630 = vmul.f32 %v621, %v627
      %v631 = vmul.f32 %v622, %v627
      %v632 = vmul.f32 %v623, %v627
      %v633 = vmul.f32 %v624, %v627
      %v634 = vmul.f32 %v625, %v627
      %v635 = vmul.f32 %v626, %v627
      %v636 = vadd.f32 %v575, %v628
      %v637 = vadd.f32 %v576, %v629
      %v638 = vadd.f32 %v577, %v630
      %v639 = vadd.f32 %v578, %v631
      %v640 = vadd.f32 %v579, %v632
      %v641 = vadd.f32 %v580, %v633
      %v642 = vadd.f32 %v581, %v634
      %v643 = vadd.f32 %v582, %v635
      %v644 = vstv %s83
      %v645 = vmul.f32 %v619, %v644
      %v646 = vmul.f32 %v620, %v644
      %v647 = vmul.f32 %v621, %v644
      %v648 = vmul.f32 %v622, %v644
      %v649 = vmul.f32 %v623, %v644
      %v650 = vmul.f32 %v624, %v644
      %v651 = vmul.f32 %v625, %v644
      %v652 = vmul.f32 %v626, %v644
      %v653 = vadd.f32 %v592, %v645
      %v654 = vadd.f32 %v593, %v646
      %v655 = vadd.f32 %v594, %v647
      %v656 = vadd.f32 %v595, %v648
      %v657 = vadd.f32 %v596, %v649
      %v658 = vadd.f32 %v597, %v650
      %v659 = vadd.f32 %v598, %v651
      %v660 = vadd.f32 %v599, %v652
      %v661 = vstv %s108
      %v662 = vmul.f32 %v619, %v661
      %v663 = vmul.f32 %v620, %v661
      %v664 = vmul.f32 %v621, %v661
      %v665 = vmul.f32 %v622, %v661
      %v666 = vmul.f32 %v623, %v661
      %v667 = vmul.f32 %v624, %v661
      %v668 = vmul.f32 %v625, %v661
      %v669 = vmul.f32 %v626, %v661
      %v670 = vadd.f32 %v609, %v662
      %v671 = vadd.f32 %v610, %v663
      %v672 = vadd.f32 %v611, %v664
      %v673 = vadd.f32 %v612, %v665
      %v674 = vadd.f32 %v613, %v666
      %v675 = vadd.f32 %v614, %v667
      %v676 = vadd.f32 %v615, %v668
      %v677 = vadd.f32 %v616, %v669
      %s678 = sadd.s32 %s248, 52
      %s679 = scalar_lea.vmem %s2, %s678
      %v680 = vld [vmem:[%s679] sm:$0xff]
      %v681 = vld [vmem:[%s679 + $0x8] sm:$0xff]
      %v682 = vld [vmem:[%s679 + $0x10] sm:$0xff]
      %v683 = vld [vmem:[%s679 + $0x18] sm:$0xff]
      %v684 = vld [vmem:[%s679 + $0x20] sm:$0xff]
      %v685 = vld [vmem:[%s679 + $0x28] sm:$0xff]
      %v686 = vld [vmem:[%s679 + $0x30] sm:$0xff]
      %v687 = vld [vmem:[%s679 + $0x38] sm:$0xff]
      %v688 = vstv %s59
      %v689 = vmul.f32 %v680, %v688
      %v690 = vmul.f32 %v681, %v688
      %v691 = vmul.f32 %v682, %v688
      %v692 = vmul.f32 %v683, %v688
      %v693 = vmul.f32 %v684, %v688
      %v694 = vmul.f32 %v685, %v688
      %v695 = vmul.f32 %v686, %v688
      %v696 = vmul.f32 %v687, %v688
      %v697 = vadd.f32 %v636, %v689
      %v698 = vadd.f32 %v637, %v690
      %v699 = vadd.f32 %v638, %v691
      %v700 = vadd.f32 %v639, %v692
      %v701 = vadd.f32 %v640, %v693
      %v702 = vadd.f32 %v641, %v694
      %v703 = vadd.f32 %v642, %v695
      %v704 = vadd.f32 %v643, %v696
      %v705 = vstv %s84
      %v706 = vmul.f32 %v680, %v705
      %v707 = vmul.f32 %v681, %v705
      %v708 = vmul.f32 %v682, %v705
      %v709 = vmul.f32 %v683, %v705
      %v710 = vmul.f32 %v684, %v705
      %v711 = vmul.f32 %v685, %v705
      %v712 = vmul.f32 %v686, %v705
      %v713 = vmul.f32 %v687, %v705
      %v714 = vadd.f32 %v653, %v706
      %v715 = vadd.f32 %v654, %v707
      %v716 = vadd.f32 %v655, %v708
      %v717 = vadd.f32 %v656, %v709
      %v718 = vadd.f32 %v657, %v710
      %v719 = vadd.f32 %v658, %v711
      %v720 = vadd.f32 %v659, %v712
      %v721 = vadd.f32 %v660, %v713
      %v722 = vstv %s109
      %v723 = vmul.f32 %v680, %v722
      %v724 = vmul.f32 %v681, %v722
      %v725 = vmul.f32 %v682, %v722
      %v726 = vmul.f32 %v683, %v722
      %v727 = vmul.f32 %v684, %v722
      %v728 = vmul.f32 %v685, %v722
      %v729 = vmul.f32 %v686, %v722
      %v730 = vmul.f32 %v687, %v722
      %v731 = vadd.f32 %v670, %v723
      %v732 = vadd.f32 %v671, %v724
      %v733 = vadd.f32 %v672, %v725
      %v734 = vadd.f32 %v673, %v726
      %v735 = vadd.f32 %v674, %v727
      %v736 = vadd.f32 %v675, %v728
      %v737 = vadd.f32 %v676, %v729
      %v738 = vadd.f32 %v677, %v730
      %s739 = sadd.s32 %s248, 53
      %s740 = scalar_lea.vmem %s2, %s739
      %v741 = vld [vmem:[%s740] sm:$0xff]
      %v742 = vld [vmem:[%s740 + $0x8] sm:$0xff]
      %v743 = vld [vmem:[%s740 + $0x10] sm:$0xff]
      %v744 = vld [vmem:[%s740 + $0x18] sm:$0xff]
      %v745 = vld [vmem:[%s740 + $0x20] sm:$0xff]
      %v746 = vld [vmem:[%s740 + $0x28] sm:$0xff]
      %v747 = vld [vmem:[%s740 + $0x30] sm:$0xff]
      %v748 = vld [vmem:[%s740 + $0x38] sm:$0xff]
      %v749 = vstv %s60
      %v750 = vmul.f32 %v741, %v749
      %v751 = vmul.f32 %v742, %v749
      %v752 = vmul.f32 %v743, %v749
      %v753 = vmul.f32 %v744, %v749
      %v754 = vmul.f32 %v745, %v749
      %v755 = vmul.f32 %v746, %v749
      %v756 = vmul.f32 %v747, %v749
      %v757 = vmul.f32 %v748, %v749
      %v758 = vadd.f32 %v697, %v750
      %v759 = vadd.f32 %v698, %v751
      %v760 = vadd.f32 %v699, %v752
      %v761 = vadd.f32 %v700, %v753
      %v762 = vadd.f32 %v701, %v754
      %v763 = vadd.f32 %v702, %v755
      %v764 = vadd.f32 %v703, %v756
      %v765 = vadd.f32 %v704, %v757
      %v766 = vstv %s85
      %v767 = vmul.f32 %v741, %v766
      %v768 = vmul.f32 %v742, %v766
      %v769 = vmul.f32 %v743, %v766
      %v770 = vmul.f32 %v744, %v766
      %v771 = vmul.f32 %v745, %v766
      %v772 = vmul.f32 %v746, %v766
      %v773 = vmul.f32 %v747, %v766
      %v774 = vmul.f32 %v748, %v766
      %v775 = vadd.f32 %v714, %v767
      %v776 = vadd.f32 %v715, %v768
      %v777 = vadd.f32 %v716, %v769
      %v778 = vadd.f32 %v717, %v770
      %v779 = vadd.f32 %v718, %v771
      %v780 = vadd.f32 %v719, %v772
      %v781 = vadd.f32 %v720, %v773
      %v782 = vadd.f32 %v721, %v774
      %v783 = vstv %s110
      %v784 = vmul.f32 %v741, %v783
      %v785 = vmul.f32 %v742, %v783
      %v786 = vmul.f32 %v743, %v783
      %v787 = vmul.f32 %v744, %v783
      %v788 = vmul.f32 %v745, %v783
      %v789 = vmul.f32 %v746, %v783
      %v790 = vmul.f32 %v747, %v783
      %v791 = vmul.f32 %v748, %v783
      %v792 = vadd.f32 %v731, %v784
      %v793 = vadd.f32 %v732, %v785
      %v794 = vadd.f32 %v733, %v786
      %v795 = vadd.f32 %v734, %v787
      %v796 = vadd.f32 %v735, %v788
      %v797 = vadd.f32 %v736, %v789
      %v798 = vadd.f32 %v737, %v790
      %v799 = vadd.f32 %v738, %v791
      %s800 = sadd.s32 %s248, 54
      %s801 = scalar_lea.vmem %s2, %s800
      %v802 = vld [vmem:[%s801] sm:$0xff]
      %v803 = vld [vmem:[%s801 + $0x8] sm:$0xff]
      %v804 = vld [vmem:[%s801 + $0x10] sm:$0xff]
      %v805 = vld [vmem:[%s801 + $0x18] sm:$0xff]
      %v806 = vld [vmem:[%s801 + $0x20] sm:$0xff]
      %v807 = vld [vmem:[%s801 + $0x28] sm:$0xff]
      %v808 = vld [vmem:[%s801 + $0x30] sm:$0xff]
      %v809 = vld [vmem:[%s801 + $0x38] sm:$0xff]
      %v810 = vstv %s61
      %v811 = vmul.f32 %v802, %v810
      %v812 = vmul.f32 %v803, %v810
      %v813 = vmul.f32 %v804, %v810
      %v814 = vmul.f32 %v805, %v810
      %v815 = vmul.f32 %v806, %v810
      %v816 = vmul.f32 %v807, %v810
      %v817 = vmul.f32 %v808, %v810
      %v818 = vmul.f32 %v809, %v810
      %v819 = vadd.f32 %v758, %v811
      %v820 = vadd.f32 %v759, %v812
      %v821 = vadd.f32 %v760, %v813
      %v822 = vadd.f32 %v761, %v814
      %v823 = vadd.f32 %v762, %v815
      %v824 = vadd.f32 %v763, %v816
      %v825 = vadd.f32 %v764, %v817
      %v826 = vadd.f32 %v765, %v818
      %v827 = vstv %s86
      %v828 = vmul.f32 %v802, %v827
      %v829 = vmul.f32 %v803, %v827
      %v830 = vmul.f32 %v804, %v827
      %v831 = vmul.f32 %v805, %v827
      %v832 = vmul.f32 %v806, %v827
      %v833 = vmul.f32 %v807, %v827
      %v834 = vmul.f32 %v808, %v827
      %v835 = vmul.f32 %v809, %v827
      %v836 = vadd.f32 %v775, %v828
      %v837 = vadd.f32 %v776, %v829
      %v838 = vadd.f32 %v777, %v830
      %v839 = vadd.f32 %v778, %v831
      %v840 = vadd.f32 %v779, %v832
      %v841 = vadd.f32 %v780, %v833
      %v842 = vadd.f32 %v781, %v834
      %v843 = vadd.f32 %v782, %v835
      %v844 = vstv %s111
      %v845 = vmul.f32 %v802, %v844
      %v846 = vmul.f32 %v803, %v844
      %v847 = vmul.f32 %v804, %v844
      %v848 = vmul.f32 %v805, %v844
      %v849 = vmul.f32 %v806, %v844
      %v850 = vmul.f32 %v807, %v844
      %v851 = vmul.f32 %v808, %v844
      %v852 = vmul.f32 %v809, %v844
      %v853 = vadd.f32 %v792, %v845
      %v854 = vadd.f32 %v793, %v846
      %v855 = vadd.f32 %v794, %v847
      %v856 = vadd.f32 %v795, %v848
      %v857 = vadd.f32 %v796, %v849
      %v858 = vadd.f32 %v797, %v850
      %v859 = vadd.f32 %v798, %v851
      %v860 = vadd.f32 %v799, %v852
      %s861 = sadd.s32 %s248, 100
      %s862 = scalar_lea.vmem %s2, %s861
      %v863 = vld [vmem:[%s862] sm:$0xff]
      %v864 = vld [vmem:[%s862 + $0x8] sm:$0xff]
      %v865 = vld [vmem:[%s862 + $0x10] sm:$0xff]
      %v866 = vld [vmem:[%s862 + $0x18] sm:$0xff]
      %v867 = vld [vmem:[%s862 + $0x20] sm:$0xff]
      %v868 = vld [vmem:[%s862 + $0x28] sm:$0xff]
      %v869 = vld [vmem:[%s862 + $0x30] sm:$0xff]
      %v870 = vld [vmem:[%s862 + $0x38] sm:$0xff]
      %v871 = vstv %s62
      %v872 = vmul.f32 %v863, %v871
      %v873 = vmul.f32 %v864, %v871
      %v874 = vmul.f32 %v865, %v871
      %v875 = vmul.f32 %v866, %v871
      %v876 = vmul.f32 %v867, %v871
      %v877 = vmul.f32 %v868, %v871
      %v878 = vmul.f32 %v869, %v871
      %v879 = vmul.f32 %v870, %v871
      %v880 = vadd.f32 %v819, %v872
      %v881 = vadd.f32 %v820, %v873
      %v882 = vadd.f32 %v821, %v874
      %v883 = vadd.f32 %v822, %v875
      %v884 = vadd.f32 %v823, %v876
      %v885 = vadd.f32 %v824, %v877
      %v886 = vadd.f32 %v825, %v878
      %v887 = vadd.f32 %v826, %v879
      %v888 = vstv %s87
      %v889 = vmul.f32 %v863, %v888
      %v890 = vmul.f32 %v864, %v888
      %v891 = vmul.f32 %v865, %v888
      %v892 = vmul.f32 %v866, %v888
      %v893 = vmul.f32 %v867, %v888
      %v894 = vmul.f32 %v868, %v888
      %v895 = vmul.f32 %v869, %v888
      %v896 = vmul.f32 %v870, %v888
      %v897 = vadd.f32 %v836, %v889
      %v898 = vadd.f32 %v837, %v890
      %v899 = vadd.f32 %v838, %v891
      %v900 = vadd.f32 %v839, %v892
      %v901 = vadd.f32 %v840, %v893
      %v902 = vadd.f32 %v841, %v894
      %v903 = vadd.f32 %v842, %v895
      %v904 = vadd.f32 %v843, %v896
      %v905 = vstv %s112
      %v906 = vmul.f32 %v863, %v905
      %v907 = vmul.f32 %v864, %v905
      %v908 = vmul.f32 %v865, %v905
      %v909 = vmul.f32 %v866, %v905
      %v910 = vmul.f32 %v867, %v905
      %v911 = vmul.f32 %v868, %v905
      %v912 = vmul.f32 %v869, %v905
      %v913 = vmul.f32 %v870, %v905
      %v914 = vadd.f32 %v853, %v906
      %v915 = vadd.f32 %v854, %v907
      %v916 = vadd.f32 %v855, %v908
      %v917 = vadd.f32 %v856, %v909
      %v918 = vadd.f32 %v857, %v910
      %v919 = vadd.f32 %v858, %v911
      %v920 = vadd.f32 %v859, %v912
      %v921 = vadd.f32 %v860, %v913
      %s922 = sadd.s32 %s248, 101
      %s923 = scalar_lea.vmem %s2, %s922
      %v924 = vld [vmem:[%s923] sm:$0xff]
      %v925 = vld [vmem:[%s923 + $0x8] sm:$0xff]
      %v926 = vld [vmem:[%s923 + $0x10] sm:$0xff]
      %v927 = vld [vmem:[%s923 + $0x18] sm:$0xff]
      %v928 = vld [vmem:[%s923 + $0x20] sm:$0xff]
      %v929 = vld [vmem:[%s923 + $0x28] sm:$0xff]
      %v930 = vld [vmem:[%s923 + $0x30] sm:$0xff]
      %v931 = vld [vmem:[%s923 + $0x38] sm:$0xff]
      %v932 = vstv %s63
      %v933 = vmul.f32 %v924, %v932
      %v934 = vmul.f32 %v925, %v932
      %v935 = vmul.f32 %v926, %v932
      %v936 = vmul.f32 %v927, %v932
      %v937 = vmul.f32 %v928, %v932
      %v938 = vmul.f32 %v929, %v932
      %v939 = vmul.f32 %v930, %v932
      %v940 = vmul.f32 %v931, %v932
      %v941 = vadd.f32 %v880, %v933
      %v942 = vadd.f32 %v881, %v934
      %v943 = vadd.f32 %v882, %v935
      %v944 = vadd.f32 %v883, %v936
      %v945 = vadd.f32 %v884, %v937
      %v946 = vadd.f32 %v885, %v938
      %v947 = vadd.f32 %v886, %v939
      %v948 = vadd.f32 %v887, %v940
      %v949 = vstv %s88
      %v950 = vmul.f32 %v924, %v949
      %v951 = vmul.f32 %v925, %v949
      %v952 = vmul.f32 %v926, %v949
      %v953 = vmul.f32 %v927, %v949
      %v954 = vmul.f32 %v928, %v949
      %v955 = vmul.f32 %v929, %v949
      %v956 = vmul.f32 %v930, %v949
      %v957 = vmul.f32 %v931, %v949
      %v958 = vadd.f32 %v897, %v950
      %v959 = vadd.f32 %v898, %v951
      %v960 = vadd.f32 %v899, %v952
      %v961 = vadd.f32 %v900, %v953
      %v962 = vadd.f32 %v901, %v954
      %v963 = vadd.f32 %v902, %v955
      %v964 = vadd.f32 %v903, %v956
      %v965 = vadd.f32 %v904, %v957
      %v966 = vstv %s113
      %v967 = vmul.f32 %v924, %v966
      %v968 = vmul.f32 %v925, %v966
      %v969 = vmul.f32 %v926, %v966
      %v970 = vmul.f32 %v927, %v966
      %v971 = vmul.f32 %v928, %v966
      %v972 = vmul.f32 %v929, %v966
      %v973 = vmul.f32 %v930, %v966
      %v974 = vmul.f32 %v931, %v966
      %v975 = vadd.f32 %v914, %v967
      %v976 = vadd.f32 %v915, %v968
      %v977 = vadd.f32 %v916, %v969
      %v978 = vadd.f32 %v917, %v970
      %v979 = vadd.f32 %v918, %v971
      %v980 = vadd.f32 %v919, %v972
      %v981 = vadd.f32 %v920, %v973
      %v982 = vadd.f32 %v921, %v974
      %s983 = sadd.s32 %s248, 102
      %s984 = scalar_lea.vmem %s2, %s983
      %v985 = vld [vmem:[%s984] sm:$0xff]
      %v986 = vld [vmem:[%s984 + $0x8] sm:$0xff]
      %v987 = vld [vmem:[%s984 + $0x10] sm:$0xff]
      %v988 = vld [vmem:[%s984 + $0x18] sm:$0xff]
      %v989 = vld [vmem:[%s984 + $0x20] sm:$0xff]
      %v990 = vld [vmem:[%s984 + $0x28] sm:$0xff]
      %v991 = vld [vmem:[%s984 + $0x30] sm:$0xff]
      %v992 = vld [vmem:[%s984 + $0x38] sm:$0xff]
      %v993 = vstv %s64
      %v994 = vmul.f32 %v985, %v993
      %v995 = vmul.f32 %v986, %v993
      %v996 = vmul.f32 %v987, %v993
      %v997 = vmul.f32 %v988, %v993
      %v998 = vmul.f32 %v989, %v993
      %v999 = vmul.f32 %v990, %v993
      %v1000 = vmul.f32 %v991, %v993
      %v1001 = vmul.f32 %v992, %v993
      %v1002 = vadd.f32 %v941, %v994
      %v1003 = vadd.f32 %v942, %v995
      %v1004 = vadd.f32 %v943, %v996
      %v1005 = vadd.f32 %v944, %v997
      %v1006 = vadd.f32 %v945, %v998
      %v1007 = vadd.f32 %v946, %v999
      %v1008 = vadd.f32 %v947, %v1000
      %v1009 = vadd.f32 %v948, %v1001
      %v1010 = vstv %s89
      %v1011 = vmul.f32 %v985, %v1010
      %v1012 = vmul.f32 %v986, %v1010
      %v1013 = vmul.f32 %v987, %v1010
      %v1014 = vmul.f32 %v988, %v1010
      %v1015 = vmul.f32 %v989, %v1010
      %v1016 = vmul.f32 %v990, %v1010
      %v1017 = vmul.f32 %v991, %v1010
      %v1018 = vmul.f32 %v992, %v1010
      %v1019 = vadd.f32 %v958, %v1011
      %v1020 = vadd.f32 %v959, %v1012
      %v1021 = vadd.f32 %v960, %v1013
      %v1022 = vadd.f32 %v961, %v1014
      %v1023 = vadd.f32 %v962, %v1015
      %v1024 = vadd.f32 %v963, %v1016
      %v1025 = vadd.f32 %v964, %v1017
      %v1026 = vadd.f32 %v965, %v1018
      %v1027 = vstv %s114
      %v1028 = vmul.f32 %v985, %v1027
      %v1029 = vmul.f32 %v986, %v1027
      %v1030 = vmul.f32 %v987, %v1027
      %v1031 = vmul.f32 %v988, %v1027
      %v1032 = vmul.f32 %v989, %v1027
      %v1033 = vmul.f32 %v990, %v1027
      %v1034 = vmul.f32 %v991, %v1027
      %v1035 = vmul.f32 %v992, %v1027
      %v1036 = vadd.f32 %v975, %v1028
      %v1037 = vadd.f32 %v976, %v1029
      %v1038 = vadd.f32 %v977, %v1030
      %v1039 = vadd.f32 %v978, %v1031
      %v1040 = vadd.f32 %v979, %v1032
      %v1041 = vadd.f32 %v980, %v1033
      %v1042 = vadd.f32 %v981, %v1034
      %v1043 = vadd.f32 %v982, %v1035
      %s1044 = sadd.s32 %s248, 103
      %s1045 = scalar_lea.vmem %s2, %s1044
      %v1046 = vld [vmem:[%s1045] sm:$0xff]
      %v1047 = vld [vmem:[%s1045 + $0x8] sm:$0xff]
      %v1048 = vld [vmem:[%s1045 + $0x10] sm:$0xff]
      %v1049 = vld [vmem:[%s1045 + $0x18] sm:$0xff]
      %v1050 = vld [vmem:[%s1045 + $0x20] sm:$0xff]
      %v1051 = vld [vmem:[%s1045 + $0x28] sm:$0xff]
      %v1052 = vld [vmem:[%s1045 + $0x30] sm:$0xff]
      %v1053 = vld [vmem:[%s1045 + $0x38] sm:$0xff]
      %v1054 = vstv %s65
      %v1055 = vmul.f32 %v1046, %v1054
      %v1056 = vmul.f32 %v1047, %v1054
      %v1057 = vmul.f32 %v1048, %v1054
      %v1058 = vmul.f32 %v1049, %v1054
      %v1059 = vmul.f32 %v1050, %v1054
      %v1060 = vmul.f32 %v1051, %v1054
      %v1061 = vmul.f32 %v1052, %v1054
      %v1062 = vmul.f32 %v1053, %v1054
      %v1063 = vadd.f32 %v1002, %v1055
      %v1064 = vadd.f32 %v1003, %v1056
      %v1065 = vadd.f32 %v1004, %v1057
      %v1066 = vadd.f32 %v1005, %v1058
      %v1067 = vadd.f32 %v1006, %v1059
      %v1068 = vadd.f32 %v1007, %v1060
      %v1069 = vadd.f32 %v1008, %v1061
      %v1070 = vadd.f32 %v1009, %v1062
      %v1071 = vstv %s90
      %v1072 = vmul.f32 %v1046, %v1071
      %v1073 = vmul.f32 %v1047, %v1071
      %v1074 = vmul.f32 %v1048, %v1071
      %v1075 = vmul.f32 %v1049, %v1071
      %v1076 = vmul.f32 %v1050, %v1071
      %v1077 = vmul.f32 %v1051, %v1071
      %v1078 = vmul.f32 %v1052, %v1071
      %v1079 = vmul.f32 %v1053, %v1071
      %v1080 = vadd.f32 %v1019, %v1072
      %v1081 = vadd.f32 %v1020, %v1073
      %v1082 = vadd.f32 %v1021, %v1074
      %v1083 = vadd.f32 %v1022, %v1075
      %v1084 = vadd.f32 %v1023, %v1076
      %v1085 = vadd.f32 %v1024, %v1077
      %v1086 = vadd.f32 %v1025, %v1078
      %v1087 = vadd.f32 %v1026, %v1079
      %v1088 = vstv %s115
      %v1089 = vmul.f32 %v1046, %v1088
      %v1090 = vmul.f32 %v1047, %v1088
      %v1091 = vmul.f32 %v1048, %v1088
      %v1092 = vmul.f32 %v1049, %v1088
      %v1093 = vmul.f32 %v1050, %v1088
      %v1094 = vmul.f32 %v1051, %v1088
      %v1095 = vmul.f32 %v1052, %v1088
      %v1096 = vmul.f32 %v1053, %v1088
      %v1097 = vadd.f32 %v1036, %v1089
      %v1098 = vadd.f32 %v1037, %v1090
      %v1099 = vadd.f32 %v1038, %v1091
      %v1100 = vadd.f32 %v1039, %v1092
      %v1101 = vadd.f32 %v1040, %v1093
      %v1102 = vadd.f32 %v1041, %v1094
      %v1103 = vadd.f32 %v1042, %v1095
      %v1104 = vadd.f32 %v1043, %v1096
      %s1105 = sadd.s32 %s248, 104
      %s1106 = scalar_lea.vmem %s2, %s1105
      %v1107 = vld [vmem:[%s1106] sm:$0xff]
      %v1108 = vld [vmem:[%s1106 + $0x8] sm:$0xff]
      %v1109 = vld [vmem:[%s1106 + $0x10] sm:$0xff]
      %v1110 = vld [vmem:[%s1106 + $0x18] sm:$0xff]
      %v1111 = vld [vmem:[%s1106 + $0x20] sm:$0xff]
      %v1112 = vld [vmem:[%s1106 + $0x28] sm:$0xff]
      %v1113 = vld [vmem:[%s1106 + $0x30] sm:$0xff]
      %v1114 = vld [vmem:[%s1106 + $0x38] sm:$0xff]
      %v1115 = vstv %s66
      %v1116 = vmul.f32 %v1107, %v1115
      %v1117 = vmul.f32 %v1108, %v1115
      %v1118 = vmul.f32 %v1109, %v1115
      %v1119 = vmul.f32 %v1110, %v1115
      %v1120 = vmul.f32 %v1111, %v1115
      %v1121 = vmul.f32 %v1112, %v1115
      %v1122 = vmul.f32 %v1113, %v1115
      %v1123 = vmul.f32 %v1114, %v1115
      %v1124 = vadd.f32 %v1063, %v1116
      %v1125 = vadd.f32 %v1064, %v1117
      %v1126 = vadd.f32 %v1065, %v1118
      %v1127 = vadd.f32 %v1066, %v1119
      %v1128 = vadd.f32 %v1067, %v1120
      %v1129 = vadd.f32 %v1068, %v1121
      %v1130 = vadd.f32 %v1069, %v1122
      %v1131 = vadd.f32 %v1070, %v1123
      %v1132 = vstv %s91
      %v1133 = vmul.f32 %v1107, %v1132
      %v1134 = vmul.f32 %v1108, %v1132
      %v1135 = vmul.f32 %v1109, %v1132
      %v1136 = vmul.f32 %v1110, %v1132
      %v1137 = vmul.f32 %v1111, %v1132
      %v1138 = vmul.f32 %v1112, %v1132
      %v1139 = vmul.f32 %v1113, %v1132
      %v1140 = vmul.f32 %v1114, %v1132
      %v1141 = vadd.f32 %v1080, %v1133
      %v1142 = vadd.f32 %v1081, %v1134
      %v1143 = vadd.f32 %v1082, %v1135
      %v1144 = vadd.f32 %v1083, %v1136
      %v1145 = vadd.f32 %v1084, %v1137
      %v1146 = vadd.f32 %v1085, %v1138
      %v1147 = vadd.f32 %v1086, %v1139
      %v1148 = vadd.f32 %v1087, %v1140
      %v1149 = vstv %s116
      %v1150 = vmul.f32 %v1107, %v1149
      %v1151 = vmul.f32 %v1108, %v1149
      %v1152 = vmul.f32 %v1109, %v1149
      %v1153 = vmul.f32 %v1110, %v1149
      %v1154 = vmul.f32 %v1111, %v1149
      %v1155 = vmul.f32 %v1112, %v1149
      %v1156 = vmul.f32 %v1113, %v1149
      %v1157 = vmul.f32 %v1114, %v1149
      %v1158 = vadd.f32 %v1097, %v1150
      %v1159 = vadd.f32 %v1098, %v1151
      %v1160 = vadd.f32 %v1099, %v1152
      %v1161 = vadd.f32 %v1100, %v1153
      %v1162 = vadd.f32 %v1101, %v1154
      %v1163 = vadd.f32 %v1102, %v1155
      %v1164 = vadd.f32 %v1103, %v1156
      %v1165 = vadd.f32 %v1104, %v1157
      %s1166 = sadd.s32 %s248, 150
      %s1167 = scalar_lea.vmem %s2, %s1166
      %v1168 = vld [vmem:[%s1167] sm:$0xff]
      %v1169 = vld [vmem:[%s1167 + $0x8] sm:$0xff]
      %v1170 = vld [vmem:[%s1167 + $0x10] sm:$0xff]
      %v1171 = vld [vmem:[%s1167 + $0x18] sm:$0xff]
      %v1172 = vld [vmem:[%s1167 + $0x20] sm:$0xff]
      %v1173 = vld [vmem:[%s1167 + $0x28] sm:$0xff]
      %v1174 = vld [vmem:[%s1167 + $0x30] sm:$0xff]
      %v1175 = vld [vmem:[%s1167 + $0x38] sm:$0xff]
      %v1176 = vstv %s67
      %v1177 = vmul.f32 %v1168, %v1176
      %v1178 = vmul.f32 %v1169, %v1176
      %v1179 = vmul.f32 %v1170, %v1176
      %v1180 = vmul.f32 %v1171, %v1176
      %v1181 = vmul.f32 %v1172, %v1176
      %v1182 = vmul.f32 %v1173, %v1176
      %v1183 = vmul.f32 %v1174, %v1176
      %v1184 = vmul.f32 %v1175, %v1176
      %v1185 = vadd.f32 %v1124, %v1177
      %v1186 = vadd.f32 %v1125, %v1178
      %v1187 = vadd.f32 %v1126, %v1179
      %v1188 = vadd.f32 %v1127, %v1180
      %v1189 = vadd.f32 %v1128, %v1181
      %v1190 = vadd.f32 %v1129, %v1182
      %v1191 = vadd.f32 %v1130, %v1183
      %v1192 = vadd.f32 %v1131, %v1184
      %v1193 = vstv %s92
      %v1194 = vmul.f32 %v1168, %v1193
      %v1195 = vmul.f32 %v1169, %v1193
      %v1196 = vmul.f32 %v1170, %v1193
      %v1197 = vmul.f32 %v1171, %v1193
      %v1198 = vmul.f32 %v1172, %v1193
      %v1199 = vmul.f32 %v1173, %v1193
      %v1200 = vmul.f32 %v1174, %v1193
      %v1201 = vmul.f32 %v1175, %v1193
      %v1202 = vadd.f32 %v1141, %v1194
      %v1203 = vadd.f32 %v1142, %v1195
      %v1204 = vadd.f32 %v1143, %v1196
      %v1205 = vadd.f32 %v1144, %v1197
      %v1206 = vadd.f32 %v1145, %v1198
      %v1207 = vadd.f32 %v1146, %v1199
      %v1208 = vadd.f32 %v1147, %v1200
      %v1209 = vadd.f32 %v1148, %v1201
      %v1210 = vstv %s117
      %v1211 = vmul.f32 %v1168, %v1210
      %v1212 = vmul.f32 %v1169, %v1210
      %v1213 = vmul.f32 %v1170, %v1210
      %v1214 = vmul.f32 %v1171, %v1210
      %v1215 = vmul.f32 %v1172, %v1210
      %v1216 = vmul.f32 %v1173, %v1210
      %v1217 = vmul.f32 %v1174, %v1210
      %v1218 = vmul.f32 %v1175, %v1210
      %v1219 = vadd.f32 %v1158, %v1211
      %v1220 = vadd.f32 %v1159, %v1212
      %v1221 = vadd.f32 %v1160, %v1213
      %v1222 = vadd.f32 %v1161, %v1214
      %v1223 = vadd.f32 %v1162, %v1215
      %v1224 = vadd.f32 %v1163, %v1216
      %v1225 = vadd.f32 %v1164, %v1217
      %v1226 = vadd.f32 %v1165, %v1218
      %s1227 = sadd.s32 %s248, 151
      %s1228 = scalar_lea.vmem %s2, %s1227
      %v1229 = vld [vmem:[%s1228] sm:$0xff]
      %v1230 = vld [vmem:[%s1228 + $0x8] sm:$0xff]
      %v1231 = vld [vmem:[%s1228 + $0x10] sm:$0xff]
      %v1232 = vld [vmem:[%s1228 + $0x18] sm:$0xff]
      %v1233 = vld [vmem:[%s1228 + $0x20] sm:$0xff]
      %v1234 = vld [vmem:[%s1228 + $0x28] sm:$0xff]
      %v1235 = vld [vmem:[%s1228 + $0x30] sm:$0xff]
      %v1236 = vld [vmem:[%s1228 + $0x38] sm:$0xff]
      %v1237 = vstv %s68
      %v1238 = vmul.f32 %v1229, %v1237
      %v1239 = vmul.f32 %v1230, %v1237
      %v1240 = vmul.f32 %v1231, %v1237
      %v1241 = vmul.f32 %v1232, %v1237
      %v1242 = vmul.f32 %v1233, %v1237
      %v1243 = vmul.f32 %v1234, %v1237
      %v1244 = vmul.f32 %v1235, %v1237
      %v1245 = vmul.f32 %v1236, %v1237
      %v1246 = vadd.f32 %v1185, %v1238
      %v1247 = vadd.f32 %v1186, %v1239
      %v1248 = vadd.f32 %v1187, %v1240
      %v1249 = vadd.f32 %v1188, %v1241
      %v1250 = vadd.f32 %v1189, %v1242
      %v1251 = vadd.f32 %v1190, %v1243
      %v1252 = vadd.f32 %v1191, %v1244
      %v1253 = vadd.f32 %v1192, %v1245
      %v1254 = vstv %s93
      %v1255 = vmul.f32 %v1229, %v1254
      %v1256 = vmul.f32 %v1230, %v1254
      %v1257 = vmul.f32 %v1231, %v1254
      %v1258 = vmul.f32 %v1232, %v1254
      %v1259 = vmul.f32 %v1233, %v1254
      %v1260 = vmul.f32 %v1234, %v1254
      %v1261 = vmul.f32 %v1235, %v1254
      %v1262 = vmul.f32 %v1236, %v1254
      %v1263 = vadd.f32 %v1202, %v1255
      %v1264 = vadd.f32 %v1203, %v1256
      %v1265 = vadd.f32 %v1204, %v1257
      %v1266 = vadd.f32 %v1205, %v1258
      %v1267 = vadd.f32 %v1206, %v1259
      %v1268 = vadd.f32 %v1207, %v1260
      %v1269 = vadd.f32 %v1208, %v1261
      %v1270 = vadd.f32 %v1209, %v1262
      %v1271 = vstv %s118
      %v1272 = vmul.f32 %v1229, %v1271
      %v1273 = vmul.f32 %v1230, %v1271
      %v1274 = vmul.f32 %v1231, %v1271
      %v1275 = vmul.f32 %v1232, %v1271
      %v1276 = vmul.f32 %v1233, %v1271
      %v1277 = vmul.f32 %v1234, %v1271
      %v1278 = vmul.f32 %v1235, %v1271
      %v1279 = vmul.f32 %v1236, %v1271
      %v1280 = vadd.f32 %v1219, %v1272
      %v1281 = vadd.f32 %v1220, %v1273
      %v1282 = vadd.f32 %v1221, %v1274
      %v1283 = vadd.f32 %v1222, %v1275
      %v1284 = vadd.f32 %v1223, %v1276
      %v1285 = vadd.f32 %v1224, %v1277
      %v1286 = vadd.f32 %v1225, %v1278
      %v1287 = vadd.f32 %v1226, %v1279
      %s1288 = sadd.s32 %s248, 152
      %s1289 = scalar_lea.vmem %s2, %s1288
      %v1290 = vld [vmem:[%s1289] sm:$0xff]
      %v1291 = vld [vmem:[%s1289 + $0x8] sm:$0xff]
      %v1292 = vld [vmem:[%s1289 + $0x10] sm:$0xff]
      %v1293 = vld [vmem:[%s1289 + $0x18] sm:$0xff]
      %v1294 = vld [vmem:[%s1289 + $0x20] sm:$0xff]
      %v1295 = vld [vmem:[%s1289 + $0x28] sm:$0xff]
      %v1296 = vld [vmem:[%s1289 + $0x30] sm:$0xff]
      %v1297 = vld [vmem:[%s1289 + $0x38] sm:$0xff]
      %v1298 = vstv %s69
      %v1299 = vmul.f32 %v1290, %v1298
      %v1300 = vmul.f32 %v1291, %v1298
      %v1301 = vmul.f32 %v1292, %v1298
      %v1302 = vmul.f32 %v1293, %v1298
      %v1303 = vmul.f32 %v1294, %v1298
      %v1304 = vmul.f32 %v1295, %v1298
      %v1305 = vmul.f32 %v1296, %v1298
      %v1306 = vmul.f32 %v1297, %v1298
      %v1307 = vadd.f32 %v1246, %v1299
      %v1308 = vadd.f32 %v1247, %v1300
      %v1309 = vadd.f32 %v1248, %v1301
      %v1310 = vadd.f32 %v1249, %v1302
      %v1311 = vadd.f32 %v1250, %v1303
      %v1312 = vadd.f32 %v1251, %v1304
      %v1313 = vadd.f32 %v1252, %v1305
      %v1314 = vadd.f32 %v1253, %v1306
      %v1315 = vstv %s94
      %v1316 = vmul.f32 %v1290, %v1315
      %v1317 = vmul.f32 %v1291, %v1315
      %v1318 = vmul.f32 %v1292, %v1315
      %v1319 = vmul.f32 %v1293, %v1315
      %v1320 = vmul.f32 %v1294, %v1315
      %v1321 = vmul.f32 %v1295, %v1315
      %v1322 = vmul.f32 %v1296, %v1315
      %v1323 = vmul.f32 %v1297, %v1315
      %v1324 = vadd.f32 %v1263, %v1316
      %v1325 = vadd.f32 %v1264, %v1317
      %v1326 = vadd.f32 %v1265, %v1318
      %v1327 = vadd.f32 %v1266, %v1319
      %v1328 = vadd.f32 %v1267, %v1320
      %v1329 = vadd.f32 %v1268, %v1321
      %v1330 = vadd.f32 %v1269, %v1322
      %v1331 = vadd.f32 %v1270, %v1323
      %v1332 = vstv %s119
      %v1333 = vmul.f32 %v1290, %v1332
      %v1334 = vmul.f32 %v1291, %v1332
      %v1335 = vmul.f32 %v1292, %v1332
      %v1336 = vmul.f32 %v1293, %v1332
      %v1337 = vmul.f32 %v1294, %v1332
      %v1338 = vmul.f32 %v1295, %v1332
      %v1339 = vmul.f32 %v1296, %v1332
      %v1340 = vmul.f32 %v1297, %v1332
      %v1341 = vadd.f32 %v1280, %v1333
      %v1342 = vadd.f32 %v1281, %v1334
      %v1343 = vadd.f32 %v1282, %v1335
      %v1344 = vadd.f32 %v1283, %v1336
      %v1345 = vadd.f32 %v1284, %v1337
      %v1346 = vadd.f32 %v1285, %v1338
      %v1347 = vadd.f32 %v1286, %v1339
      %v1348 = vadd.f32 %v1287, %v1340
      %s1349 = sadd.s32 %s248, 153
      %s1350 = scalar_lea.vmem %s2, %s1349
      %v1351 = vld [vmem:[%s1350] sm:$0xff]
      %v1352 = vld [vmem:[%s1350 + $0x8] sm:$0xff]
      %v1353 = vld [vmem:[%s1350 + $0x10] sm:$0xff]
      %v1354 = vld [vmem:[%s1350 + $0x18] sm:$0xff]
      %v1355 = vld [vmem:[%s1350 + $0x20] sm:$0xff]
      %v1356 = vld [vmem:[%s1350 + $0x28] sm:$0xff]
      %v1357 = vld [vmem:[%s1350 + $0x30] sm:$0xff]
      %v1358 = vld [vmem:[%s1350 + $0x38] sm:$0xff]
      %v1359 = vstv %s70
      %v1360 = vmul.f32 %v1351, %v1359
      %v1361 = vmul.f32 %v1352, %v1359
      %v1362 = vmul.f32 %v1353, %v1359
      %v1363 = vmul.f32 %v1354, %v1359
      %v1364 = vmul.f32 %v1355, %v1359
      %v1365 = vmul.f32 %v1356, %v1359
      %v1366 = vmul.f32 %v1357, %v1359
      %v1367 = vmul.f32 %v1358, %v1359
      %v1368 = vadd.f32 %v1307, %v1360
      %v1369 = vadd.f32 %v1308, %v1361
      %v1370 = vadd.f32 %v1309, %v1362
      %v1371 = vadd.f32 %v1310, %v1363
      %v1372 = vadd.f32 %v1311, %v1364
      %v1373 = vadd.f32 %v1312, %v1365
      %v1374 = vadd.f32 %v1313, %v1366
      %v1375 = vadd.f32 %v1314, %v1367
      %v1376 = vstv %s95
      %v1377 = vmul.f32 %v1351, %v1376
      %v1378 = vmul.f32 %v1352, %v1376
      %v1379 = vmul.f32 %v1353, %v1376
      %v1380 = vmul.f32 %v1354, %v1376
      %v1381 = vmul.f32 %v1355, %v1376
      %v1382 = vmul.f32 %v1356, %v1376
      %v1383 = vmul.f32 %v1357, %v1376
      %v1384 = vmul.f32 %v1358, %v1376
      %v1385 = vadd.f32 %v1324, %v1377
      %v1386 = vadd.f32 %v1325, %v1378
      %v1387 = vadd.f32 %v1326, %v1379
      %v1388 = vadd.f32 %v1327, %v1380
      %v1389 = vadd.f32 %v1328, %v1381
      %v1390 = vadd.f32 %v1329, %v1382
      %v1391 = vadd.f32 %v1330, %v1383
      %v1392 = vadd.f32 %v1331, %v1384
      %v1393 = vstv %s120
      %v1394 = vmul.f32 %v1351, %v1393
      %v1395 = vmul.f32 %v1352, %v1393
      %v1396 = vmul.f32 %v1353, %v1393
      %v1397 = vmul.f32 %v1354, %v1393
      %v1398 = vmul.f32 %v1355, %v1393
      %v1399 = vmul.f32 %v1356, %v1393
      %v1400 = vmul.f32 %v1357, %v1393
      %v1401 = vmul.f32 %v1358, %v1393
      %v1402 = vadd.f32 %v1341, %v1394
      %v1403 = vadd.f32 %v1342, %v1395
      %v1404 = vadd.f32 %v1343, %v1396
      %v1405 = vadd.f32 %v1344, %v1397
      %v1406 = vadd.f32 %v1345, %v1398
      %v1407 = vadd.f32 %v1346, %v1399
      %v1408 = vadd.f32 %v1347, %v1400
      %v1409 = vadd.f32 %v1348, %v1401
      %s1410 = sadd.s32 %s248, 154
      %s1411 = scalar_lea.vmem %s2, %s1410
      %v1412 = vld [vmem:[%s1411] sm:$0xff]
      %v1413 = vld [vmem:[%s1411 + $0x8] sm:$0xff]
      %v1414 = vld [vmem:[%s1411 + $0x10] sm:$0xff]
      %v1415 = vld [vmem:[%s1411 + $0x18] sm:$0xff]
      %v1416 = vld [vmem:[%s1411 + $0x20] sm:$0xff]
      %v1417 = vld [vmem:[%s1411 + $0x28] sm:$0xff]
      %v1418 = vld [vmem:[%s1411 + $0x30] sm:$0xff]
      %v1419 = vld [vmem:[%s1411 + $0x38] sm:$0xff]
      %v1420 = vstv %s71
      %v1421 = vmul.f32 %v1412, %v1420
      %v1422 = vmul.f32 %v1413, %v1420
      %v1423 = vmul.f32 %v1414, %v1420
      %v1424 = vmul.f32 %v1415, %v1420
      %v1425 = vmul.f32 %v1416, %v1420
      %v1426 = vmul.f32 %v1417, %v1420
      %v1427 = vmul.f32 %v1418, %v1420
      %v1428 = vmul.f32 %v1419, %v1420
      %v1429 = vadd.f32 %v1368, %v1421
      %v1430 = vadd.f32 %v1369, %v1422
      %v1431 = vadd.f32 %v1370, %v1423
      %v1432 = vadd.f32 %v1371, %v1424
      %v1433 = vadd.f32 %v1372, %v1425
      %v1434 = vadd.f32 %v1373, %v1426
      %v1435 = vadd.f32 %v1374, %v1427
      %v1436 = vadd.f32 %v1375, %v1428
      %v1437 = vstv %s96
      %v1438 = vmul.f32 %v1412, %v1437
      %v1439 = vmul.f32 %v1413, %v1437
      %v1440 = vmul.f32 %v1414, %v1437
      %v1441 = vmul.f32 %v1415, %v1437
      %v1442 = vmul.f32 %v1416, %v1437
      %v1443 = vmul.f32 %v1417, %v1437
      %v1444 = vmul.f32 %v1418, %v1437
      %v1445 = vmul.f32 %v1419, %v1437
      %v1446 = vadd.f32 %v1385, %v1438
      %v1447 = vadd.f32 %v1386, %v1439
      %v1448 = vadd.f32 %v1387, %v1440
      %v1449 = vadd.f32 %v1388, %v1441
      %v1450 = vadd.f32 %v1389, %v1442
      %v1451 = vadd.f32 %v1390, %v1443
      %v1452 = vadd.f32 %v1391, %v1444
      %v1453 = vadd.f32 %v1392, %v1445
      %v1454 = vstv %s121
      %v1455 = vmul.f32 %v1412, %v1454
      %v1456 = vmul.f32 %v1413, %v1454
      %v1457 = vmul.f32 %v1414, %v1454
      %v1458 = vmul.f32 %v1415, %v1454
      %v1459 = vmul.f32 %v1416, %v1454
      %v1460 = vmul.f32 %v1417, %v1454
      %v1461 = vmul.f32 %v1418, %v1454
      %v1462 = vmul.f32 %v1419, %v1454
      %v1463 = vadd.f32 %v1402, %v1455
      %v1464 = vadd.f32 %v1403, %v1456
      %v1465 = vadd.f32 %v1404, %v1457
      %v1466 = vadd.f32 %v1405, %v1458
      %v1467 = vadd.f32 %v1406, %v1459
      %v1468 = vadd.f32 %v1407, %v1460
      %v1469 = vadd.f32 %v1408, %v1461
      %v1470 = vadd.f32 %v1409, %v1462
      %s1471 = sadd.s32 %s248, 200
      %s1472 = scalar_lea.vmem %s2, %s1471
      %v1473 = vld [vmem:[%s1472] sm:$0xff]
      %v1474 = vld [vmem:[%s1472 + $0x8] sm:$0xff]
      %v1475 = vld [vmem:[%s1472 + $0x10] sm:$0xff]
      %v1476 = vld [vmem:[%s1472 + $0x18] sm:$0xff]
      %v1477 = vld [vmem:[%s1472 + $0x20] sm:$0xff]
      %v1478 = vld [vmem:[%s1472 + $0x28] sm:$0xff]
      %v1479 = vld [vmem:[%s1472 + $0x30] sm:$0xff]
      %v1480 = vld [vmem:[%s1472 + $0x38] sm:$0xff]
      %v1481 = vstv %s72
      %v1482 = vmul.f32 %v1473, %v1481
      %v1483 = vmul.f32 %v1474, %v1481
      %v1484 = vmul.f32 %v1475, %v1481
      %v1485 = vmul.f32 %v1476, %v1481
      %v1486 = vmul.f32 %v1477, %v1481
      %v1487 = vmul.f32 %v1478, %v1481
      %v1488 = vmul.f32 %v1479, %v1481
      %v1489 = vmul.f32 %v1480, %v1481
      %v1490 = vadd.f32 %v1429, %v1482
      %v1491 = vadd.f32 %v1430, %v1483
      %v1492 = vadd.f32 %v1431, %v1484
      %v1493 = vadd.f32 %v1432, %v1485
      %v1494 = vadd.f32 %v1433, %v1486
      %v1495 = vadd.f32 %v1434, %v1487
      %v1496 = vadd.f32 %v1435, %v1488
      %v1497 = vadd.f32 %v1436, %v1489
      %v1498 = vstv %s97
      %v1499 = vmul.f32 %v1473, %v1498
      %v1500 = vmul.f32 %v1474, %v1498
      %v1501 = vmul.f32 %v1475, %v1498
      %v1502 = vmul.f32 %v1476, %v1498
      %v1503 = vmul.f32 %v1477, %v1498
      %v1504 = vmul.f32 %v1478, %v1498
      %v1505 = vmul.f32 %v1479, %v1498
      %v1506 = vmul.f32 %v1480, %v1498
      %v1507 = vadd.f32 %v1446, %v1499
      %v1508 = vadd.f32 %v1447, %v1500
      %v1509 = vadd.f32 %v1448, %v1501
      %v1510 = vadd.f32 %v1449, %v1502
      %v1511 = vadd.f32 %v1450, %v1503
      %v1512 = vadd.f32 %v1451, %v1504
      %v1513 = vadd.f32 %v1452, %v1505
      %v1514 = vadd.f32 %v1453, %v1506
      %v1515 = vstv %s122
      %v1516 = vmul.f32 %v1473, %v1515
      %v1517 = vmul.f32 %v1474, %v1515
      %v1518 = vmul.f32 %v1475, %v1515
      %v1519 = vmul.f32 %v1476, %v1515
      %v1520 = vmul.f32 %v1477, %v1515
      %v1521 = vmul.f32 %v1478, %v1515
      %v1522 = vmul.f32 %v1479, %v1515
      %v1523 = vmul.f32 %v1480, %v1515
      %v1524 = vadd.f32 %v1463, %v1516
      %v1525 = vadd.f32 %v1464, %v1517
      %v1526 = vadd.f32 %v1465, %v1518
      %v1527 = vadd.f32 %v1466, %v1519
      %v1528 = vadd.f32 %v1467, %v1520
      %v1529 = vadd.f32 %v1468, %v1521
      %v1530 = vadd.f32 %v1469, %v1522
      %v1531 = vadd.f32 %v1470, %v1523
      %s1532 = sadd.s32 %s248, 201
      %s1533 = scalar_lea.vmem %s2, %s1532
      %v1534 = vld [vmem:[%s1533] sm:$0xff]
      %v1535 = vld [vmem:[%s1533 + $0x8] sm:$0xff]
      %v1536 = vld [vmem:[%s1533 + $0x10] sm:$0xff]
      %v1537 = vld [vmem:[%s1533 + $0x18] sm:$0xff]
      %v1538 = vld [vmem:[%s1533 + $0x20] sm:$0xff]
      %v1539 = vld [vmem:[%s1533 + $0x28] sm:$0xff]
      %v1540 = vld [vmem:[%s1533 + $0x30] sm:$0xff]
      %v1541 = vld [vmem:[%s1533 + $0x38] sm:$0xff]
      %v1542 = vstv %s73
      %v1543 = vmul.f32 %v1534, %v1542
      %v1544 = vmul.f32 %v1535, %v1542
      %v1545 = vmul.f32 %v1536, %v1542
      %v1546 = vmul.f32 %v1537, %v1542
      %v1547 = vmul.f32 %v1538, %v1542
      %v1548 = vmul.f32 %v1539, %v1542
      %v1549 = vmul.f32 %v1540, %v1542
      %v1550 = vmul.f32 %v1541, %v1542
      %v1551 = vadd.f32 %v1490, %v1543
      %v1552 = vadd.f32 %v1491, %v1544
      %v1553 = vadd.f32 %v1492, %v1545
      %v1554 = vadd.f32 %v1493, %v1546
      %v1555 = vadd.f32 %v1494, %v1547
      %v1556 = vadd.f32 %v1495, %v1548
      %v1557 = vadd.f32 %v1496, %v1549
      %v1558 = vadd.f32 %v1497, %v1550
      %v1559 = vstv %s98
      %v1560 = vmul.f32 %v1534, %v1559
      %v1561 = vmul.f32 %v1535, %v1559
      %v1562 = vmul.f32 %v1536, %v1559
      %v1563 = vmul.f32 %v1537, %v1559
      %v1564 = vmul.f32 %v1538, %v1559
      %v1565 = vmul.f32 %v1539, %v1559
      %v1566 = vmul.f32 %v1540, %v1559
      %v1567 = vmul.f32 %v1541, %v1559
      %v1568 = vadd.f32 %v1507, %v1560
      %v1569 = vadd.f32 %v1508, %v1561
      %v1570 = vadd.f32 %v1509, %v1562
      %v1571 = vadd.f32 %v1510, %v1563
      %v1572 = vadd.f32 %v1511, %v1564
      %v1573 = vadd.f32 %v1512, %v1565
      %v1574 = vadd.f32 %v1513, %v1566
      %v1575 = vadd.f32 %v1514, %v1567
      %v1576 = vstv %s123
      %v1577 = vmul.f32 %v1534, %v1576
      %v1578 = vmul.f32 %v1535, %v1576
      %v1579 = vmul.f32 %v1536, %v1576
      %v1580 = vmul.f32 %v1537, %v1576
      %v1581 = vmul.f32 %v1538, %v1576
      %v1582 = vmul.f32 %v1539, %v1576
      %v1583 = vmul.f32 %v1540, %v1576
      %v1584 = vmul.f32 %v1541, %v1576
      %v1585 = vadd.f32 %v1524, %v1577
      %v1586 = vadd.f32 %v1525, %v1578
      %v1587 = vadd.f32 %v1526, %v1579
      %v1588 = vadd.f32 %v1527, %v1580
      %v1589 = vadd.f32 %v1528, %v1581
      %v1590 = vadd.f32 %v1529, %v1582
      %v1591 = vadd.f32 %v1530, %v1583
      %v1592 = vadd.f32 %v1531, %v1584
      %s1593 = sadd.s32 %s248, 202
      %s1594 = scalar_lea.vmem %s2, %s1593
      %v1595 = vld [vmem:[%s1594] sm:$0xff]
      %v1596 = vld [vmem:[%s1594 + $0x8] sm:$0xff]
      %v1597 = vld [vmem:[%s1594 + $0x10] sm:$0xff]
      %v1598 = vld [vmem:[%s1594 + $0x18] sm:$0xff]
      %v1599 = vld [vmem:[%s1594 + $0x20] sm:$0xff]
      %v1600 = vld [vmem:[%s1594 + $0x28] sm:$0xff]
      %v1601 = vld [vmem:[%s1594 + $0x30] sm:$0xff]
      %v1602 = vld [vmem:[%s1594 + $0x38] sm:$0xff]
      %v1603 = vstv %s74
      %v1604 = vmul.f32 %v1595, %v1603
      %v1605 = vmul.f32 %v1596, %v1603
      %v1606 = vmul.f32 %v1597, %v1603
      %v1607 = vmul.f32 %v1598, %v1603
      %v1608 = vmul.f32 %v1599, %v1603
      %v1609 = vmul.f32 %v1600, %v1603
      %v1610 = vmul.f32 %v1601, %v1603
      %v1611 = vmul.f32 %v1602, %v1603
      %v1612 = vadd.f32 %v1551, %v1604
      %v1613 = vadd.f32 %v1552, %v1605
      %v1614 = vadd.f32 %v1553, %v1606
      %v1615 = vadd.f32 %v1554, %v1607
      %v1616 = vadd.f32 %v1555, %v1608
      %v1617 = vadd.f32 %v1556, %v1609
      %v1618 = vadd.f32 %v1557, %v1610
      %v1619 = vadd.f32 %v1558, %v1611
      %v1620 = vstv %s99
      %v1621 = vmul.f32 %v1595, %v1620
      %v1622 = vmul.f32 %v1596, %v1620
      %v1623 = vmul.f32 %v1597, %v1620
      %v1624 = vmul.f32 %v1598, %v1620
      %v1625 = vmul.f32 %v1599, %v1620
      %v1626 = vmul.f32 %v1600, %v1620
      %v1627 = vmul.f32 %v1601, %v1620
      %v1628 = vmul.f32 %v1602, %v1620
      %v1629 = vadd.f32 %v1568, %v1621
      %v1630 = vadd.f32 %v1569, %v1622
      %v1631 = vadd.f32 %v1570, %v1623
      %v1632 = vadd.f32 %v1571, %v1624
      %v1633 = vadd.f32 %v1572, %v1625
      %v1634 = vadd.f32 %v1573, %v1626
      %v1635 = vadd.f32 %v1574, %v1627
      %v1636 = vadd.f32 %v1575, %v1628
      %v1637 = vstv %s124
      %v1638 = vmul.f32 %v1595, %v1637
      %v1639 = vmul.f32 %v1596, %v1637
      %v1640 = vmul.f32 %v1597, %v1637
      %v1641 = vmul.f32 %v1598, %v1637
      %v1642 = vmul.f32 %v1599, %v1637
      %v1643 = vmul.f32 %v1600, %v1637
      %v1644 = vmul.f32 %v1601, %v1637
      %v1645 = vmul.f32 %v1602, %v1637
      %v1646 = vadd.f32 %v1585, %v1638
      %v1647 = vadd.f32 %v1586, %v1639
      %v1648 = vadd.f32 %v1587, %v1640
      %v1649 = vadd.f32 %v1588, %v1641
      %v1650 = vadd.f32 %v1589, %v1642
      %v1651 = vadd.f32 %v1590, %v1643
      %v1652 = vadd.f32 %v1591, %v1644
      %v1653 = vadd.f32 %v1592, %v1645
      %s1654 = sadd.s32 %s248, 203
      %s1655 = scalar_lea.vmem %s2, %s1654
      %v1656 = vld [vmem:[%s1655] sm:$0xff]
      %v1657 = vld [vmem:[%s1655 + $0x8] sm:$0xff]
      %v1658 = vld [vmem:[%s1655 + $0x10] sm:$0xff]
      %v1659 = vld [vmem:[%s1655 + $0x18] sm:$0xff]
      %v1660 = vld [vmem:[%s1655 + $0x20] sm:$0xff]
      %v1661 = vld [vmem:[%s1655 + $0x28] sm:$0xff]
      %v1662 = vld [vmem:[%s1655 + $0x30] sm:$0xff]
      %v1663 = vld [vmem:[%s1655 + $0x38] sm:$0xff]
      %v1664 = vstv %s75
      %v1665 = vmul.f32 %v1656, %v1664
      %v1666 = vmul.f32 %v1657, %v1664
      %v1667 = vmul.f32 %v1658, %v1664
      %v1668 = vmul.f32 %v1659, %v1664
      %v1669 = vmul.f32 %v1660, %v1664
      %v1670 = vmul.f32 %v1661, %v1664
      %v1671 = vmul.f32 %v1662, %v1664
      %v1672 = vmul.f32 %v1663, %v1664
      %v1673 = vadd.f32 %v1612, %v1665
      %v1674 = vadd.f32 %v1613, %v1666
      %v1675 = vadd.f32 %v1614, %v1667
      %v1676 = vadd.f32 %v1615, %v1668
      %v1677 = vadd.f32 %v1616, %v1669
      %v1678 = vadd.f32 %v1617, %v1670
      %v1679 = vadd.f32 %v1618, %v1671
      %v1680 = vadd.f32 %v1619, %v1672
      %v1681 = vstv %s100
      %v1682 = vmul.f32 %v1656, %v1681
      %v1683 = vmul.f32 %v1657, %v1681
      %v1684 = vmul.f32 %v1658, %v1681
      %v1685 = vmul.f32 %v1659, %v1681
      %v1686 = vmul.f32 %v1660, %v1681
      %v1687 = vmul.f32 %v1661, %v1681
      %v1688 = vmul.f32 %v1662, %v1681
      %v1689 = vmul.f32 %v1663, %v1681
      %v1690 = vadd.f32 %v1629, %v1682
      %v1691 = vadd.f32 %v1630, %v1683
      %v1692 = vadd.f32 %v1631, %v1684
      %v1693 = vadd.f32 %v1632, %v1685
      %v1694 = vadd.f32 %v1633, %v1686
      %v1695 = vadd.f32 %v1634, %v1687
      %v1696 = vadd.f32 %v1635, %v1688
      %v1697 = vadd.f32 %v1636, %v1689
      %v1698 = vstv %s125
      %v1699 = vmul.f32 %v1656, %v1698
      %v1700 = vmul.f32 %v1657, %v1698
      %v1701 = vmul.f32 %v1658, %v1698
      %v1702 = vmul.f32 %v1659, %v1698
      %v1703 = vmul.f32 %v1660, %v1698
      %v1704 = vmul.f32 %v1661, %v1698
      %v1705 = vmul.f32 %v1662, %v1698
      %v1706 = vmul.f32 %v1663, %v1698
      %v1707 = vadd.f32 %v1646, %v1699
      %v1708 = vadd.f32 %v1647, %v1700
      %v1709 = vadd.f32 %v1648, %v1701
      %v1710 = vadd.f32 %v1649, %v1702
      %v1711 = vadd.f32 %v1650, %v1703
      %v1712 = vadd.f32 %v1651, %v1704
      %v1713 = vadd.f32 %v1652, %v1705
      %v1714 = vadd.f32 %v1653, %v1706
      %s1715 = sadd.s32 %s248, 204
      %s1716 = scalar_lea.vmem %s2, %s1715
      %v1717 = vld [vmem:[%s1716] sm:$0xff]
      %v1718 = vld [vmem:[%s1716 + $0x8] sm:$0xff]
      %v1719 = vld [vmem:[%s1716 + $0x10] sm:$0xff]
      %v1720 = vld [vmem:[%s1716 + $0x18] sm:$0xff]
      %v1721 = vld [vmem:[%s1716 + $0x20] sm:$0xff]
      %v1722 = vld [vmem:[%s1716 + $0x28] sm:$0xff]
      %v1723 = vld [vmem:[%s1716 + $0x30] sm:$0xff]
      %v1724 = vld [vmem:[%s1716 + $0x38] sm:$0xff]
      %v1725 = vstv %s76
      %v1726 = vmul.f32 %v1717, %v1725
      %v1727 = vmul.f32 %v1718, %v1725
      %v1728 = vmul.f32 %v1719, %v1725
      %v1729 = vmul.f32 %v1720, %v1725
      %v1730 = vmul.f32 %v1721, %v1725
      %v1731 = vmul.f32 %v1722, %v1725
      %v1732 = vmul.f32 %v1723, %v1725
      %v1733 = vmul.f32 %v1724, %v1725
      %v1734 = vadd.f32 %v1673, %v1726
      %v1735 = vadd.f32 %v1674, %v1727
      %v1736 = vadd.f32 %v1675, %v1728
      %v1737 = vadd.f32 %v1676, %v1729
      %v1738 = vadd.f32 %v1677, %v1730
      %v1739 = vadd.f32 %v1678, %v1731
      %v1740 = vadd.f32 %v1679, %v1732
      %v1741 = vadd.f32 %v1680, %v1733
      %v1742 = vstv %s101
      %v1743 = vmul.f32 %v1717, %v1742
      %v1744 = vmul.f32 %v1718, %v1742
      %v1745 = vmul.f32 %v1719, %v1742
      %v1746 = vmul.f32 %v1720, %v1742
      %v1747 = vmul.f32 %v1721, %v1742
      %v1748 = vmul.f32 %v1722, %v1742
      %v1749 = vmul.f32 %v1723, %v1742
      %v1750 = vmul.f32 %v1724, %v1742
      %v1751 = vadd.f32 %v1690, %v1743
      %v1752 = vadd.f32 %v1691, %v1744
      %v1753 = vadd.f32 %v1692, %v1745
      %v1754 = vadd.f32 %v1693, %v1746
      %v1755 = vadd.f32 %v1694, %v1747
      %v1756 = vadd.f32 %v1695, %v1748
      %v1757 = vadd.f32 %v1696, %v1749
      %v1758 = vadd.f32 %v1697, %v1750
      %v1759 = vstv %s126
      %v1760 = vmul.f32 %v1717, %v1759
      %v1761 = vmul.f32 %v1718, %v1759
      %v1762 = vmul.f32 %v1719, %v1759
      %v1763 = vmul.f32 %v1720, %v1759
      %v1764 = vmul.f32 %v1721, %v1759
      %v1765 = vmul.f32 %v1722, %v1759
      %v1766 = vmul.f32 %v1723, %v1759
      %v1767 = vmul.f32 %v1724, %v1759
      %v1768 = vadd.f32 %v1707, %v1760
      %v1769 = vadd.f32 %v1708, %v1761
      %v1770 = vadd.f32 %v1709, %v1762
      %v1771 = vadd.f32 %v1710, %v1763
      %v1772 = vadd.f32 %v1711, %v1764
      %v1773 = vadd.f32 %v1712, %v1765
      %v1774 = vadd.f32 %v1713, %v1766
      %v1775 = vadd.f32 %v1714, %v1767
      %v1776 = vmax.f32 %v1734, 0.0
      %v1777 = vmax.f32 %v1735, 0.0
      %v1778 = vmax.f32 %v1736, 0.0
      %v1779 = vmax.f32 %v1737, 0.0
      %v1780 = vmax.f32 %v1738, 0.0
      %v1781 = vmax.f32 %v1739, 0.0
      %v1782 = vmax.f32 %v1740, 0.0
      %v1783 = vmax.f32 %v1741, 0.0
      %v1784 = vpack.c.bf16 %v1777, %v1776
      %v1785 = vpack.c.bf16 %v1779, %v1778
      %v1786 = vpack.c.bf16 %v1781, %v1780
      %v1787 = vpack.c.bf16 %v1783, %v1782
      %v1788 = vmax.f32 %v1751, 0.0
      %v1789 = vmax.f32 %v1752, 0.0
      %v1790 = vmax.f32 %v1753, 0.0
      %v1791 = vmax.f32 %v1754, 0.0
      %v1792 = vmax.f32 %v1755, 0.0
      %v1793 = vmax.f32 %v1756, 0.0
      %v1794 = vmax.f32 %v1757, 0.0
      %v1795 = vmax.f32 %v1758, 0.0
      %v1796 = vpack.c.bf16 %v1789, %v1788
      %v1797 = vpack.c.bf16 %v1791, %v1790
      %v1798 = vpack.c.bf16 %v1793, %v1792
      %v1799 = vpack.c.bf16 %v1795, %v1794
      %v1800 = vmax.f32 %v1768, 0.0
      %v1801 = vmax.f32 %v1769, 0.0
      %v1802 = vmax.f32 %v1770, 0.0
      %v1803 = vmax.f32 %v1771, 0.0
      %v1804 = vmax.f32 %v1772, 0.0
      %v1805 = vmax.f32 %v1773, 0.0
      %v1806 = vmax.f32 %v1774, 0.0
      %v1807 = vmax.f32 %v1775, 0.0
      %v1808 = vpack.c.bf16 %v1801, %v1800
      %v1809 = vpack.c.bf16 %v1803, %v1802
      %v1810 = vpack.c.bf16 %v1805, %v1804
      %v1811 = vpack.c.bf16 %v1807, %v1806
      %s1812 = smul.u32 %s243, 16
      %s1813 = smul.addr %s1812, 4
      %s1814 = scalar_lea.vmem %s3, %s1813
      %v1815 = vld [vmem:[%s1814] sm:$0xf]
      %v1816 = vld [vmem:[%s1814 + $0x4] sm:$0xf]
      %v1817 = vld [vmem:[%s1814 + $0x8] sm:$0xf]
      %v1818 = vld [vmem:[%s1814 + $0xc] sm:$0xf]
      %v1819 = vld [vmem:[%s1814 + $0x10] sm:$0xf]
      %v1820 = vld [vmem:[%s1814 + $0x14] sm:$0xf]
      %v1821 = vld [vmem:[%s1814 + $0x18] sm:$0xf]
      %v1822 = vld [vmem:[%s1814 + $0x1c] sm:$0xf]
      %v1823 = vld [vmem:[%s1814 + $0x20] sm:$0xf]
      %v1824 = vld [vmem:[%s1814 + $0x24] sm:$0xf]
      %v1825 = vld [vmem:[%s1814 + $0x28] sm:$0xf]
      %v1826 = vld [vmem:[%s1814 + $0x2c] sm:$0xf]
      %v1827 = vld [vmem:[%s1814 + $0x30] sm:$0xf]
      %v1828 = vld [vmem:[%s1814 + $0x34] sm:$0xf]
      %v1829 = vld [vmem:[%s1814 + $0x38] sm:$0xf]
      %v1830 = vld [vmem:[%s1814 + $0x3c] sm:$0xf]
      %s1831 = sadd.s32 %s243, 36
      %s1832 = smul.u32 %s1831, 16
      %s1833 = smul.addr %s1832, 4
      %s1834 = scalar_lea.vmem %s3, %s1833
      %v1835 = vld [vmem:[%s1834] sm:$0xf]
      %v1836 = vld [vmem:[%s1834 + $0x4] sm:$0xf]
      %v1837 = vld [vmem:[%s1834 + $0x8] sm:$0xf]
      %v1838 = vld [vmem:[%s1834 + $0xc] sm:$0xf]
      %v1839 = vld [vmem:[%s1834 + $0x10] sm:$0xf]
      %v1840 = vld [vmem:[%s1834 + $0x14] sm:$0xf]
      %v1841 = vld [vmem:[%s1834 + $0x18] sm:$0xf]
      %v1842 = vld [vmem:[%s1834 + $0x1c] sm:$0xf]
      %v1843 = vld [vmem:[%s1834 + $0x20] sm:$0xf]
      %v1844 = vld [vmem:[%s1834 + $0x24] sm:$0xf]
      %v1845 = vld [vmem:[%s1834 + $0x28] sm:$0xf]
      %v1846 = vld [vmem:[%s1834 + $0x2c] sm:$0xf]
      %v1847 = vld [vmem:[%s1834 + $0x30] sm:$0xf]
      %v1848 = vld [vmem:[%s1834 + $0x34] sm:$0xf]
      %v1849 = vld [vmem:[%s1834 + $0x38] sm:$0xf]
      %v1850 = vld [vmem:[%s1834 + $0x3c] sm:$0xf]
      %v1867 = vunpack.c.l.b16 %v1835
      %v1868 = vunpack.c.l.b16 %v1836
      %v1869 = vunpack.c.l.b16 %v1837
      %v1870 = vunpack.c.l.b16 %v1838
      %v1871 = vunpack.c.l.b16 %v1839
      %v1872 = vunpack.c.l.b16 %v1840
      %v1873 = vunpack.c.l.b16 %v1841
      %v1874 = vunpack.c.l.b16 %v1842
      %v1875 = vunpack.c.l.b16 %v1843
      %v1876 = vunpack.c.l.b16 %v1844
      %v1877 = vunpack.c.l.b16 %v1845
      %v1878 = vunpack.c.l.b16 %v1846
      %v1879 = vunpack.c.l.b16 %v1847
      %v1880 = vunpack.c.l.b16 %v1848
      %v1881 = vunpack.c.l.b16 %v1849
      %v1882 = vunpack.c.l.b16 %v1850
      %v1883 = vpack.c.b16 %v1868, %v1867
      %v1884 = vpack.c.b16 %v1870, %v1869
      %v1885 = vpack.c.b16 %v1872, %v1871
      %v1886 = vpack.c.b16 %v1874, %v1873
      %v1887 = vpack.c.b16 %v1876, %v1875
      %v1888 = vpack.c.b16 %v1878, %v1877
      %v1889 = vpack.c.b16 %v1880, %v1879
      %v1890 = vpack.c.b16 %v1882, %v1881
      %vm1891 = vcmask 523264
      %v1893 = vsel %vm1891, %v1883, 0
      %v1896 = vsel %vm1891, %v1884, 0
      %v1899 = vsel %vm1891, %v1885, 0
      %v1902 = vsel %vm1891, %v1886, 0
      %v1905 = vsel %vm1891, %v1887, 0
      %v1908 = vsel %vm1891, %v1888, 0
      %v1911 = vsel %vm1891, %v1889, 0
      %v1914 = vsel %vm1891, %v1890, 0
      %1916 = vmatpush.bf16.msra.mxu0 0
      %1917 = vmatpush.bf16.msra.mxu0 0
      %1918 = vmatpush.bf16.msra.mxu0 0
      %1919 = vmatpush.bf16.msra.mxu0 0
      %1920 = vmatpush.bf16.msra.mxu0 %v1799
      %1921 = vmatpush.bf16.msra.mxu0 %v1798
      %1922 = vmatpush.bf16.msra.mxu0 %v1797
      %1923 = vmatpush.bf16.msra.mxu0 %v1796
      %1924 = vmatmul.bf16.gmra.mxu0 %v1893
      %v1925 = vpop.f32.mrf.mxu0
      %v1926 = vadd.f32 0.0, %v1925
      %v1927 = vpop.f32.mrf.mxu0
      %v1928 = vadd.f32 0.0, %v1927
      %1929 = vmatmul.bf16.gmra.mxu0 %v1896
      %v1930 = vpop.f32.mrf.mxu0
      %v1931 = vadd.f32 0.0, %v1930
      %v1932 = vpop.f32.mrf.mxu0
      %v1933 = vadd.f32 0.0, %v1932
      %1934 = vmatmul.bf16.gmra.mxu0 %v1899
      %v1935 = vpop.f32.mrf.mxu0
      %v1936 = vadd.f32 0.0, %v1935
      %v1937 = vpop.f32.mrf.mxu0
      %v1938 = vadd.f32 0.0, %v1937
      %1939 = vmatmul.bf16.gmra.mxu0 %v1902
      %v1940 = vpop.f32.mrf.mxu0
      %v1941 = vadd.f32 0.0, %v1940
      %v1942 = vpop.f32.mrf.mxu0
      %v1943 = vadd.f32 0.0, %v1942
      %1944 = vmatmul.bf16.gmra.mxu0 %v1905
      %v1945 = vpop.f32.mrf.mxu0
      %v1946 = vadd.f32 0.0, %v1945
      %v1947 = vpop.f32.mrf.mxu0
      %v1948 = vadd.f32 0.0, %v1947
      %1949 = vmatmul.bf16.gmra.mxu0 %v1908
      %v1950 = vpop.f32.mrf.mxu0
      %v1951 = vadd.f32 0.0, %v1950
      %v1952 = vpop.f32.mrf.mxu0
      %v1953 = vadd.f32 0.0, %v1952
      %1954 = vmatmul.bf16.gmra.mxu0 %v1911
      %v1955 = vpop.f32.mrf.mxu0
      %v1956 = vadd.f32 0.0, %v1955
      %v1957 = vpop.f32.mrf.mxu0
      %v1958 = vadd.f32 0.0, %v1957
      %1959 = vmatmul.bf16.gmra.mxu0 %v1914
      %v1960 = vpop.f32.mrf.mxu0
      %v1961 = vadd.f32 0.0, %v1960
      %v1962 = vpop.f32.mrf.mxu0
      %v1963 = vadd.f32 0.0, %v1962
      %1964 = vdwg.mxu0
      %v1981 = vunpack.c.l.b16 %v1815
      %v1982 = vunpack.c.l.b16 %v1816
      %v1983 = vunpack.c.l.b16 %v1817
      %v1984 = vunpack.c.l.b16 %v1818
      %v1985 = vunpack.c.l.b16 %v1819
      %v1986 = vunpack.c.l.b16 %v1820
      %v1987 = vunpack.c.l.b16 %v1821
      %v1988 = vunpack.c.l.b16 %v1822
      %v1989 = vunpack.c.l.b16 %v1823
      %v1990 = vunpack.c.l.b16 %v1824
      %v1991 = vunpack.c.l.b16 %v1825
      %v1992 = vunpack.c.l.b16 %v1826
      %v1993 = vunpack.c.l.b16 %v1827
      %v1994 = vunpack.c.l.b16 %v1828
      %v1995 = vunpack.c.l.b16 %v1829
      %v1996 = vunpack.c.l.b16 %v1830
      %v1997 = vpack.c.b16 %v1982, %v1981
      %v1998 = vpack.c.b16 %v1984, %v1983
      %v1999 = vpack.c.b16 %v1986, %v1985
      %v2000 = vpack.c.b16 %v1988, %v1987
      %v2001 = vpack.c.b16 %v1990, %v1989
      %v2002 = vpack.c.b16 %v1992, %v1991
      %v2003 = vpack.c.b16 %v1994, %v1993
      %v2004 = vpack.c.b16 %v1996, %v1995
      %v2006 = vsel %vm1891, %v1997, 0
      %v2009 = vsel %vm1891, %v1998, 0
      %v2012 = vsel %vm1891, %v1999, 0
      %v2015 = vsel %vm1891, %v2000, 0
      %v2018 = vsel %vm1891, %v2001, 0
      %v2021 = vsel %vm1891, %v2002, 0
      %v2024 = vsel %vm1891, %v2003, 0
      %v2027 = vsel %vm1891, %v2004, 0
      %2029 = vmatpush.bf16.msra.mxu0 0
      %2030 = vmatpush.bf16.msra.mxu0 0
      %2031 = vmatpush.bf16.msra.mxu0 0
      %2032 = vmatpush.bf16.msra.mxu0 0
      %2033 = vmatpush.bf16.msra.mxu0 %v1787
      %2034 = vmatpush.bf16.msra.mxu0 %v1786
      %2035 = vmatpush.bf16.msra.mxu0 %v1785
      %2036 = vmatpush.bf16.msra.mxu0 %v1784
      %2037 = vmatmul.bf16.gmra.mxu0 %v2006
      %v2038 = vpop.f32.mrf.mxu0
      %v2039 = vadd.f32 %v1926, %v2038
      %v2040 = vpop.f32.mrf.mxu0
      %v2041 = vadd.f32 %v1928, %v2040
      %2042 = vmatmul.bf16.gmra.mxu0 %v2009
      %v2043 = vpop.f32.mrf.mxu0
      %v2044 = vadd.f32 %v1931, %v2043
      %v2045 = vpop.f32.mrf.mxu0
      %v2046 = vadd.f32 %v1933, %v2045
      %2047 = vmatmul.bf16.gmra.mxu0 %v2012
      %v2048 = vpop.f32.mrf.mxu0
      %v2049 = vadd.f32 %v1936, %v2048
      %v2050 = vpop.f32.mrf.mxu0
      %v2051 = vadd.f32 %v1938, %v2050
      %2052 = vmatmul.bf16.gmra.mxu0 %v2015
      %v2053 = vpop.f32.mrf.mxu0
      %v2054 = vadd.f32 %v1941, %v2053
      %v2055 = vpop.f32.mrf.mxu0
      %v2056 = vadd.f32 %v1943, %v2055
      %2057 = vmatmul.bf16.gmra.mxu0 %v2018
      %v2058 = vpop.f32.mrf.mxu0
      %v2059 = vadd.f32 %v1946, %v2058
      %v2060 = vpop.f32.mrf.mxu0
      %v2061 = vadd.f32 %v1948, %v2060
      %2062 = vmatmul.bf16.gmra.mxu0 %v2021
      %v2063 = vpop.f32.mrf.mxu0
      %v2064 = vadd.f32 %v1951, %v2063
      %v2065 = vpop.f32.mrf.mxu0
      %v2066 = vadd.f32 %v1953, %v2065
      %2067 = vmatmul.bf16.gmra.mxu0 %v2024
      %v2068 = vpop.f32.mrf.mxu0
      %v2069 = vadd.f32 %v1956, %v2068
      %v2070 = vpop.f32.mrf.mxu0
      %v2071 = vadd.f32 %v1958, %v2070
      %2072 = vmatmul.bf16.gmra.mxu0 %v2027
      %v2073 = vpop.f32.mrf.mxu0
      %v2074 = vadd.f32 %v1961, %v2073
      %v2075 = vpop.f32.mrf.mxu0
      %v2076 = vadd.f32 %v1963, %v2075
      %2077 = vdwg.mxu0
      %s2078 = sadd.s32 %s243, 72
      %s2079 = smul.u32 %s2078, 16
      %s2080 = smul.addr %s2079, 4
      %s2081 = scalar_lea.vmem %s3, %s2080
      %v2082 = vld [vmem:[%s2081] sm:$0xf]
      %v2083 = vld [vmem:[%s2081 + $0x4] sm:$0xf]
      %v2084 = vld [vmem:[%s2081 + $0x8] sm:$0xf]
      %v2085 = vld [vmem:[%s2081 + $0xc] sm:$0xf]
      %v2086 = vld [vmem:[%s2081 + $0x10] sm:$0xf]
      %v2087 = vld [vmem:[%s2081 + $0x14] sm:$0xf]
      %v2088 = vld [vmem:[%s2081 + $0x18] sm:$0xf]
      %v2089 = vld [vmem:[%s2081 + $0x1c] sm:$0xf]
      %v2090 = vld [vmem:[%s2081 + $0x20] sm:$0xf]
      %v2091 = vld [vmem:[%s2081 + $0x24] sm:$0xf]
      %v2092 = vld [vmem:[%s2081 + $0x28] sm:$0xf]
      %v2093 = vld [vmem:[%s2081 + $0x2c] sm:$0xf]
      %v2094 = vld [vmem:[%s2081 + $0x30] sm:$0xf]
      %v2095 = vld [vmem:[%s2081 + $0x34] sm:$0xf]
      %v2096 = vld [vmem:[%s2081 + $0x38] sm:$0xf]
      %v2097 = vld [vmem:[%s2081 + $0x3c] sm:$0xf]
      %v2114 = vunpack.c.l.b16 %v2082
      %v2115 = vunpack.c.l.b16 %v2083
      %v2116 = vunpack.c.l.b16 %v2084
      %v2117 = vunpack.c.l.b16 %v2085
      %v2118 = vunpack.c.l.b16 %v2086
      %v2119 = vunpack.c.l.b16 %v2087
      %v2120 = vunpack.c.l.b16 %v2088
      %v2121 = vunpack.c.l.b16 %v2089
      %v2122 = vunpack.c.l.b16 %v2090
      %v2123 = vunpack.c.l.b16 %v2091
      %v2124 = vunpack.c.l.b16 %v2092
      %v2125 = vunpack.c.l.b16 %v2093
      %v2126 = vunpack.c.l.b16 %v2094
      %v2127 = vunpack.c.l.b16 %v2095
      %v2128 = vunpack.c.l.b16 %v2096
      %v2129 = vunpack.c.l.b16 %v2097
      %v2130 = vpack.c.b16 %v2115, %v2114
      %v2131 = vpack.c.b16 %v2117, %v2116
      %v2132 = vpack.c.b16 %v2119, %v2118
      %v2133 = vpack.c.b16 %v2121, %v2120
      %v2134 = vpack.c.b16 %v2123, %v2122
      %v2135 = vpack.c.b16 %v2125, %v2124
      %v2136 = vpack.c.b16 %v2127, %v2126
      %v2137 = vpack.c.b16 %v2129, %v2128
      %v2139 = vsel %vm1891, %v2130, 0
      %v2142 = vsel %vm1891, %v2131, 0
      %v2145 = vsel %vm1891, %v2132, 0
      %v2148 = vsel %vm1891, %v2133, 0
      %v2151 = vsel %vm1891, %v2134, 0
      %v2154 = vsel %vm1891, %v2135, 0
      %v2157 = vsel %vm1891, %v2136, 0
      %v2160 = vsel %vm1891, %v2137, 0
      %2162 = vmatpush.bf16.msra.mxu0 0
      %2163 = vmatpush.bf16.msra.mxu0 0
      %2164 = vmatpush.bf16.msra.mxu0 0
      %2165 = vmatpush.bf16.msra.mxu0 0
      %2166 = vmatpush.bf16.msra.mxu0 %v1811
      %2167 = vmatpush.bf16.msra.mxu0 %v1810
      %2168 = vmatpush.bf16.msra.mxu0 %v1809
      %2169 = vmatpush.bf16.msra.mxu0 %v1808
      %2170 = vmatmul.bf16.gmra.mxu0 %v2139
      %v2171 = vpop.f32.mrf.mxu0
      %v2172 = vadd.f32 0.0, %v2171
      %v2173 = vpop.f32.mrf.mxu0
      %v2174 = vadd.f32 0.0, %v2173
      %2175 = vmatmul.bf16.gmra.mxu0 %v2142
      %v2176 = vpop.f32.mrf.mxu0
      %v2177 = vadd.f32 0.0, %v2176
      %v2178 = vpop.f32.mrf.mxu0
      %v2179 = vadd.f32 0.0, %v2178
      %2180 = vmatmul.bf16.gmra.mxu0 %v2145
      %v2181 = vpop.f32.mrf.mxu0
      %v2182 = vadd.f32 0.0, %v2181
      %v2183 = vpop.f32.mrf.mxu0
      %v2184 = vadd.f32 0.0, %v2183
      %2185 = vmatmul.bf16.gmra.mxu0 %v2148
      %v2186 = vpop.f32.mrf.mxu0
      %v2187 = vadd.f32 0.0, %v2186
      %v2188 = vpop.f32.mrf.mxu0
      %v2189 = vadd.f32 0.0, %v2188
      %2190 = vmatmul.bf16.gmra.mxu0 %v2151
      %v2191 = vpop.f32.mrf.mxu0
      %v2192 = vadd.f32 0.0, %v2191
      %v2193 = vpop.f32.mrf.mxu0
      %v2194 = vadd.f32 0.0, %v2193
      %2195 = vmatmul.bf16.gmra.mxu0 %v2154
      %v2196 = vpop.f32.mrf.mxu0
      %v2197 = vadd.f32 0.0, %v2196
      %v2198 = vpop.f32.mrf.mxu0
      %v2199 = vadd.f32 0.0, %v2198
      %2200 = vmatmul.bf16.gmra.mxu0 %v2157
      %v2201 = vpop.f32.mrf.mxu0
      %v2202 = vadd.f32 0.0, %v2201
      %v2203 = vpop.f32.mrf.mxu0
      %v2204 = vadd.f32 0.0, %v2203
      %2205 = vmatmul.bf16.gmra.mxu0 %v2160
      %v2206 = vpop.f32.mrf.mxu0
      %v2207 = vadd.f32 0.0, %v2206
      %v2208 = vpop.f32.mrf.mxu0
      %v2209 = vadd.f32 0.0, %v2208
      %2210 = vdwg.mxu0
      %v2211 = vadd.f32 %v2039, %v2172
      %v2212 = vadd.f32 %v2041, %v2174
      %v2213 = vadd.f32 %v2044, %v2177
      %v2214 = vadd.f32 %v2046, %v2179
      %v2215 = vadd.f32 %v2049, %v2182
      %v2216 = vadd.f32 %v2051, %v2184
      %v2217 = vadd.f32 %v2054, %v2187
      %v2218 = vadd.f32 %v2056, %v2189
      %v2219 = vadd.f32 %v2059, %v2192
      %v2220 = vadd.f32 %v2061, %v2194
      %v2221 = vadd.f32 %v2064, %v2197
      %v2222 = vadd.f32 %v2066, %v2199
      %v2223 = vadd.f32 %v2069, %v2202
      %v2224 = vadd.f32 %v2071, %v2204
      %v2225 = vadd.f32 %v2074, %v2207
      %v2226 = vadd.f32 %v2076, %v2209
      %v2227 = vld [vmem:[#allocation2] sm:$0xff]
      %v2228 = vld [vmem:[#allocation2 + $0x8] sm:$0xff]
      %v2229 = vld [vmem:[#allocation2 + $0x10] sm:$0xff]
      %v2230 = vld [vmem:[#allocation2 + $0x18] sm:$0xff]
      %v2231 = vld [vmem:[#allocation2 + $0x20] sm:$0xff]
      %v2232 = vld [vmem:[#allocation2 + $0x28] sm:$0xff]
      %v2233 = vld [vmem:[#allocation2 + $0x30] sm:$0xff]
      %v2234 = vld [vmem:[#allocation2 + $0x38] sm:$0xff]
      %v2235 = vld [vmem:[#allocation2 + $0x40] sm:$0xff]
      %v2236 = vld [vmem:[#allocation2 + $0x48] sm:$0xff]
      %v2237 = vld [vmem:[#allocation2 + $0x50] sm:$0xff]
      %v2238 = vld [vmem:[#allocation2 + $0x58] sm:$0xff]
      %v2239 = vld [vmem:[#allocation2 + $0x60] sm:$0xff]
      %v2240 = vld [vmem:[#allocation2 + $0x68] sm:$0xff]
      %v2241 = vld [vmem:[#allocation2 + $0x70] sm:$0xff]
      %v2242 = vld [vmem:[#allocation2 + $0x78] sm:$0xff]
      %v2243 = vadd.f32 %v2227, %v2211
      %v2244 = vadd.f32 %v2228, %v2212
      %v2245 = vadd.f32 %v2229, %v2213
      %v2246 = vadd.f32 %v2230, %v2214
      %v2247 = vadd.f32 %v2231, %v2215
      %v2248 = vadd.f32 %v2232, %v2216
      %v2249 = vadd.f32 %v2233, %v2217
      %v2250 = vadd.f32 %v2234, %v2218
      %v2251 = vadd.f32 %v2235, %v2219
      %v2252 = vadd.f32 %v2236, %v2220
      %v2253 = vadd.f32 %v2237, %v2221
      %v2254 = vadd.f32 %v2238, %v2222
      %v2255 = vadd.f32 %v2239, %v2223
      %v2256 = vadd.f32 %v2240, %v2224
      %v2257 = vadd.f32 %v2241, %v2225
      %v2258 = vadd.f32 %v2242, %v2226
      %2259 = vst [vmem:[#allocation2] sm:$0xff] %v2243
      %2260 = vst [vmem:[#allocation2 + $0x8] sm:$0xff] %v2244
      %2261 = vst [vmem:[#allocation2 + $0x10] sm:$0xff] %v2245
      %2262 = vst [vmem:[#allocation2 + $0x18] sm:$0xff] %v2246
      %2263 = vst [vmem:[#allocation2 + $0x20] sm:$0xff] %v2247
      %2264 = vst [vmem:[#allocation2 + $0x28] sm:$0xff] %v2248
      %2265 = vst [vmem:[#allocation2 + $0x30] sm:$0xff] %v2249
      %2266 = vst [vmem:[#allocation2 + $0x38] sm:$0xff] %v2250
      %2267 = vst [vmem:[#allocation2 + $0x40] sm:$0xff] %v2251
      %2268 = vst [vmem:[#allocation2 + $0x48] sm:$0xff] %v2252
      %2269 = vst [vmem:[#allocation2 + $0x50] sm:$0xff] %v2253
      %2270 = vst [vmem:[#allocation2 + $0x58] sm:$0xff] %v2254
      %2271 = vst [vmem:[#allocation2 + $0x60] sm:$0xff] %v2255
      %2272 = vst [vmem:[#allocation2 + $0x68] sm:$0xff] %v2256
      %2273 = vst [vmem:[#allocation2 + $0x70] sm:$0xff] %v2257
      %2274 = vst [vmem:[#allocation2 + $0x78] sm:$0xff] %v2258
    $region42: #{calvis1cnn_forward.1} parent=1 // loop_footer
      %s247 = sadd.s32 1, %s243
    $region43: #{calvis1cnn_forward.1} parent=1 // loop_footer_branch
      %242 = sbr.rel target = $region39
    $region44: #{calvis1cnn_forward.1} parent=1 // loop_exit
      _
    %v2275 = vld [vmem:[#allocation2] sm:$0xff]
    %v2276 = vld [vmem:[#allocation2 + $0x8] sm:$0xff]
    %v2277 = vld [vmem:[#allocation2 + $0x10] sm:$0xff]
    %v2278 = vld [vmem:[#allocation2 + $0x18] sm:$0xff]
    %v2279 = vld [vmem:[#allocation2 + $0x20] sm:$0xff]
    %v2280 = vld [vmem:[#allocation2 + $0x28] sm:$0xff]
    %v2281 = vld [vmem:[#allocation2 + $0x30] sm:$0xff]
    %v2282 = vld [vmem:[#allocation2 + $0x38] sm:$0xff]
    %v2283 = vld [vmem:[#allocation2 + $0x40] sm:$0xff]
    %v2284 = vld [vmem:[#allocation2 + $0x48] sm:$0xff]
    %v2285 = vld [vmem:[#allocation2 + $0x50] sm:$0xff]
    %v2286 = vld [vmem:[#allocation2 + $0x58] sm:$0xff]
    %v2287 = vld [vmem:[#allocation2 + $0x60] sm:$0xff]
    %v2288 = vld [vmem:[#allocation2 + $0x68] sm:$0xff]
    %v2289 = vld [vmem:[#allocation2 + $0x70] sm:$0xff]
    %v2290 = vld [vmem:[#allocation2 + $0x78] sm:$0xff]
    %v2291 = vmax.f32 %v2275, 0.0
    %v2292 = vmax.f32 %v2276, 0.0
    %v2293 = vmax.f32 %v2277, 0.0
    %v2294 = vmax.f32 %v2278, 0.0
    %v2295 = vmax.f32 %v2279, 0.0
    %v2296 = vmax.f32 %v2280, 0.0
    %v2297 = vmax.f32 %v2281, 0.0
    %v2298 = vmax.f32 %v2282, 0.0
    %v2299 = vmax.f32 %v2283, 0.0
    %v2300 = vmax.f32 %v2284, 0.0
    %v2301 = vmax.f32 %v2285, 0.0
    %v2302 = vmax.f32 %v2286, 0.0
    %v2303 = vmax.f32 %v2287, 0.0
    %v2304 = vmax.f32 %v2288, 0.0
    %v2305 = vmax.f32 %v2289, 0.0
    %v2306 = vmax.f32 %v2290, 0.0
    %v2307 = vld [vmem:[%s5] sm:$0x7]
    %v2308 = vld [vmem:[%s6] sm:$0x7]
    %2310 = vset.pattern.permute.xlu0 0
    %2311 = vperm.xlu0 %2310, %v2308
    %v2312 = vpop.permute.xlu0 %2311
    %2314 = vmatpush.msra.mxu0 %v2306
    %2315 = vmatpush.msra.mxu0 %v2305
    %2316 = vmatpush.msra.mxu0 %v2304
    %2317 = vmatpush.msra.mxu0 %v2303
    %2318 = vmatpush.msra.mxu0 %v2302
    %2319 = vmatpush.msra.mxu0 %v2301
    %2320 = vmatpush.msra.mxu0 %v2300
    %2321 = vmatpush.msra.mxu0 %v2299
    %2322 = vmatpush.msra.mxu0 %v2298
    %2323 = vmatpush.msra.mxu0 %v2297
    %2324 = vmatpush.msra.mxu0 %v2296
    %2325 = vmatpush.msra.mxu0 %v2295
    %2326 = vmatpush.msra.mxu0 %v2294
    %2327 = vmatpush.msra.mxu0 %v2293
    %2328 = vmatpush.msra.mxu0 %v2292
    %2329 = vmatpush.msra.mxu0 %v2291
    %2330 = vmatmul.f32.gmra.mxu0 %v2307
    %v2331 = vpop.f32.mrf.mxu0
    %v2332 = vadd.f32 %v2312, %v2331
    %2333 = vdwg.mxu0
    %2334 = vst [vmem:[%s7] sm:$0x7] %v2332
    // Predicated region
    $region45: #{calvis1cnn_forward.1} parent=1 // pred_check
      _
    $region46: #{calvis1cnn_forward.1} parent=1 // pred_check_branch
      %2336 = sbr.rel (0) target = $region48
    $region47: #{calvis1cnn_forward.1} parent=1 // pred_region
      _
    $region48: #{calvis1cnn_forward.1} parent=1 // pred_fallthru
      _
    // Predicated region
    $region49: #{calvis1cnn_forward.1} parent=1 // pred_check
      _
    $region50: #{calvis1cnn_forward.1} parent=1 // pred_check_branch
      %2338 = sbr.rel (0) target = $region52
    $region51: #{calvis1cnn_forward.1} parent=1 // pred_region
      _
    $region52: #{calvis1cnn_forward.1} parent=1 // pred_fallthru
      _
    %2339 = vsyncpa [#allocation4], 1
    %2340 = vsyncpa [#allocation6], 1

</llo_original>
